<compile_context>
chip_gen: v6e
topology: v6e:2x2x1
jax: 0.10.0
libtpu: 0.0.40
codegen_flags: <defaults>
</compile_context>

<pallas_src>
import jax
import jax.numpy as jnp
from jax.experimental import pallas as pl
from jax.experimental.pallas import tpu as pltpu

_LANE = 128


def _round_up(x, m):
    return ((x + m - 1) // m) * m


def _make_stgat_kernel(num_blocks, graphs_per_step, n_nodes, mm_dtype):
    """Fused kernel: all `num_blocks` GAT blocks on `graphs_per_step` graphs."""
    G, N = graphs_per_step, n_nodes

    def kernel(h_ref, bias_ref, *refs):
        out_ref = refs[-1]
        params = refs[:-1]                       # (W, a_src_col, a_dst_row) per block

        h = h_ref[...].astype(jnp.float32)       # (G*N, F_in_pad), lane-dense

        for blk in range(num_blocks):            # static Python loop over blocks
            W = params[3 * blk][...]             # (F_prev_pad, F_pad)
            a_src = params[3 * blk + 1][...]     # (F_pad, 1)
            a_dst = params[3 * blk + 2][...]     # (1, F_pad)

            # Shared-weight projection for ALL graphs of this step: one MXU matmul.
            Wh = jnp.dot(h.astype(mm_dtype), W.astype(mm_dtype),
                         preferred_element_type=jnp.float32)          # (G*N, F_pad)

            # Source attention projection for all graphs at once (MXU, column layout).
            src = jnp.dot(Wh, a_src, preferred_element_type=jnp.float32)  # (G*N, 1)

            h_next = []
            for g in range(G):                   # static per-graph loop
                lo = g * N
                Wh_g = Wh[lo:lo + N, :]          # (N, F_pad)  (N % 8 == 0 -> clean slice)
                src_g = src[lo:lo + N, :]        # (N, 1)

                # dst directly in row layout: contract Wh_g's feature axis as
                # the RHS -> (1, N); avoids the (N,1)->(1,N) transpose.
                dst_g = jax.lax.dot_general(
                    a_dst, Wh_g,
                    dimension_numbers=(((1,), (1,)), ((), ())),
                    preferred_element_type=jnp.float32)               # (1, N)

                e = src_g + dst_g                # (N, N) via broadcast add
                e = jnp.maximum(e, 0.2 * e)      # LeakyReLU(0.2)
                if blk == 0:
                    # Only block 0 gets a real adjacency (additive -9e15 bias,
                    # precomputed on the host); later blocks use all-ones, for
                    # which the mask is a no-op and is dropped entirely.
                    e = e + bias_ref[...]

                # Numerically stable softmax over neighbors; the 1/denom is
                # folded in after the aggregation matmul.
                e = e - jnp.max(e, axis=-1, keepdims=True)
                p = jnp.exp(e)
                inv = pl.reciprocal(jnp.sum(p, axis=-1, keepdims=True))  # exact

                hp = jnp.dot(p.astype(mm_dtype), Wh_g.astype(mm_dtype),
                             preferred_element_type=jnp.float32) * inv
                # ELU (clamp before exp: no overflow / wasted EUP work in the
                # discarded branch).
                hp = jnp.where(hp > 0, hp, jnp.exp(jnp.minimum(hp, 0.0)) - 1.0)
                h_next.append(hp)

            h = h_next[0] if G == 1 else jnp.concatenate(h_next, axis=0)

        out_ref[...] = h.astype(out_ref.dtype)   # lane-dense (G*N, F_out_pad) store

    return kernel


def _pad_block_params(block_params, f_in_pad):
    """Zero-pad feature dims to multiples of 128 lanes and split the attention
    vector into column (a_src) / row (a_dst) layouts.

    Exact transformation: padded W rows multiply zero inputs, padded W columns
    produce zero features, zero a-entries ignore them, and ELU(0)=0, so padded
    features stay exactly zero through every block.
    """
    padded = []
    prev = f_in_pad
    for (W, a) in block_params:
        f_in_b, f_out_b = W.shape
        f_out_pad = _round_up(f_out_b, _LANE)
        Wp = jnp.zeros((prev, f_out_pad), jnp.float32)
        Wp = Wp.at[:f_in_b, :f_out_b].set(W.astype(jnp.float32))
        a_src = jnp.zeros((f_out_pad, 1), jnp.float32)
        a_src = a_src.at[:f_out_b, 0].set(a[0].astype(jnp.float32))
        a_dst = jnp.zeros((1, f_out_pad), jnp.float32)
        a_dst = a_dst.at[0, :f_out_b].set(a[1].astype(jnp.float32))
        padded.append((Wp, a_src, a_dst))
        prev = f_out_pad
    return padded


def _default_grid_steps(batch):
    """v7x has 2 TensorCores -> keep >=2 parallel grid steps there; the
    single-TC chips (v5e / v6e) collapse the whole batch into one step."""
    kind = ""
    try:
        kind = jax.devices()[0].device_kind.lower()
    except Exception:
        pass
    n_cores = 2 if "v7" in kind else 1
    return max(1, min(batch, n_cores))


def stgat_forward(h, adj_mat, block_params, *, mm_dtype=jnp.float32,
                  grid_steps=None):
    """Exact semantics of STGAT.forward, fused into a single Pallas kernel.

    h:            [B, N, F_in]
    adj_mat:      [N, N]   (only used by block 0, as in the PyTorch module)
    block_params: list of (W [F_in_b, F_out_b], a [2, F_out_b]) per block.
    """
    B, N, F_in = h.shape
    num_blocks = len(block_params)
    f_out_last = block_params[-1][0].shape[1]

    if grid_steps is None:
        grid_steps = _default_grid_steps(B)
    G = -(-B // grid_steps)                  # graphs per grid step
    B_pad = G * grid_steps

    F_in_pad = _round_up(F_in, _LANE)
    padded_params = _pad_block_params(block_params, F_in_pad)
    f_out_pad = padded_params[-1][0].shape[1]

    # Host-side padding: batch to B_pad, feature lanes to 128; flatten
    # (graph, node) so each grid step sees one lane-dense 2-D slab.
    h_p = jnp.zeros((B_pad, N, F_in_pad), jnp.float32)
    h_p = h_p.at[:B, :, :F_in].set(h.astype(jnp.float32))
    h2 = h_p.reshape(B_pad * N, F_in_pad)

    # Block-0 adjacency mask as an additive bias (one VPU add in-kernel).
    bias = jnp.where(adj_mat > 0, 0.0, -9e15).astype(jnp.float32)

    in_specs = [
        pl.BlockSpec((G * N, F_in_pad), lambda s: (s, 0)),   # per-step h slab
        pl.BlockSpec((N, N), lambda s: (0, 0)),              # block-0 bias
    ]
    flat_params = []
    for (Wp, a_src, a_dst) in padded_params:
        in_specs.append(pl.BlockSpec(Wp.shape, lambda s: (0, 0)))
        in_specs.append(pl.BlockSpec(a_src.shape, lambda s: (0, 0)))
        in_specs.append(pl.BlockSpec(a_dst.shape, lambda s: (0, 0)))
        flat_params += [Wp, a_src, a_dst]

    out2d = pl.pallas_call(
        _make_stgat_kernel(num_blocks, G, N, mm_dtype),
        out_shape=jax.ShapeDtypeStruct((B_pad * N, f_out_pad), jnp.float32),
        grid_spec=pltpu.PrefetchScalarGridSpec(
            num_scalar_prefetch=0,
            grid=(grid_steps,),
            in_specs=in_specs,
            out_specs=pl.BlockSpec((G * N, f_out_pad), lambda s: (s, 0)),
        ),
        compiler_params=pltpu.CompilerParams(
            dimension_semantics=("parallel",)),
    )(h2, bias, *flat_params)

    out = out2d.reshape(B_pad, N, f_out_pad)
    # Strip batch + lane padding back to the true output shape.
    return out[:B, :, :f_out_last]


def stgat_reference(h, adj_mat, block_params):
    """Pure-JAX reference with the original STGAT.forward semantics."""
    h_prime = h
    for blk, (W, a) in enumerate(block_params):
        n = h_prime.shape[-2]
        adj = adj_mat if blk == 0 else jnp.ones((n, n), jnp.float32)
        Wh = jnp.einsum("bnf,fo->bno", h_prime, W)
        src = jnp.sum(Wh * a[0], -1, keepdims=True)
        dst = jnp.sum(Wh * a[1], -1, keepdims=True)
        e = src + jnp.swapaxes(dst, -1, -2)
        e = jnp.where(e > 0, e, 0.2 * e)
        e = jnp.where(adj > 0, e, jnp.float32(-9e15))
        e = e - e.max(-1, keepdims=True)
        p = jnp.exp(e)
        alpha = p / p.sum(-1, keepdims=True)
        hp = jnp.einsum("bnm,bmo->bno", alpha, Wh)
        h_prime = jnp.where(hp > 0, hp, jnp.exp(jnp.minimum(hp, 0.0)) - 1.0)
    return h_prime


def make_block_params(key, dims):
    """Deterministic parameter init for each block: dims = [F0, F1, ..., Fk]."""
    params = []
    for i in range(len(dims) - 1):
        key, k1, k2 = jax.random.split(key, 3)
        f_in, f_out = dims[i], dims[i + 1]
        W = jax.random.normal(k1, (f_in, f_out), jnp.float32) * 0.1
        a = jax.random.normal(k2, (2, f_out), jnp.float32) * 0.1
        params.append((W, a))
    return params


if __name__ == "__main__":
    key = jax.random.PRNGKey(0)
    k_h, k_adj, k_p = jax.random.split(key, 3)

    B, N = 2, 16
    dims = [8, 32, 8]          # two ST-GAT blocks: 8 -> 32 -> 8

    h = jax.random.normal(k_h, (B, N, dims[0]), jnp.float32)
    # Symmetric-ish binary adjacency with self loops (no isolated rows).
    adj_raw = jax.random.uniform(k_adj, (N, N)) > 0.5
    adj = (adj_raw | adj_raw.T | jnp.eye(N, dtype=bool)).astype(jnp.float32)

    params = make_block_params(k_p, dims)

    fwd = jax.jit(stgat_forward)
    out = fwd(h, adj, params)
    jax.block_until_ready(out)
    assert out.shape == (B, N, dims[-1])

    # Correctness against a pure-JAX reference. Exact softmax reciprocal ->
    # much tighter tolerance than the previous approx-reciprocal version.
    ref = stgat_reference(h, adj, params)
    assert jnp.allclose(out, ref, rtol=1e-3, atol=1e-3), "mismatch vs reference"

    print("KERNEL_OK")
</pallas_src>

<mosaic_0001>
module attributes {stable_mosaic.version = 11 : i64} {
  func.func @kernel(%arg0: i32, %arg1: memref<32x128xf32, #tpu.memory_space<vmem>>, %arg2: memref<16x16xf32, #tpu.memory_space<vmem>>, %arg3: memref<128x128xf32, #tpu.memory_space<vmem>>, %arg4: memref<128x1xf32, #tpu.memory_space<vmem>>, %arg5: memref<1x128xf32, #tpu.memory_space<vmem>>, %arg6: memref<128x128xf32, #tpu.memory_space<vmem>>, %arg7: memref<128x1xf32, #tpu.memory_space<vmem>>, %arg8: memref<1x128xf32, #tpu.memory_space<vmem>>, %arg9: memref<32x128xf32, #tpu.memory_space<vmem>>) attributes {dimension_semantics = [#tpu.dimension_semantics<parallel>], iteration_bounds = array<i64: 1>, scalar_prefetch = 0 : i64, scratch_operands = 0 : i64, tpu.core_type = #tpu.core_type<tc>, window_params = [{transform_indices = @transform_0, window_bounds = array<i64: 32, 128>}, {pipeline_mode = #tpu.pipeline_mode<synchronous>, transform_indices = @transform_1, window_bounds = array<i64: 16, 16>}, {pipeline_mode = #tpu.pipeline_mode<synchronous>, transform_indices = @transform_2, window_bounds = array<i64: 128, 128>}, {pipeline_mode = #tpu.pipeline_mode<synchronous>, transform_indices = @transform_3, window_bounds = array<i64: 128, 1>}, {pipeline_mode = #tpu.pipeline_mode<synchronous>, transform_indices = @transform_4, window_bounds = array<i64: 1, 128>}, {pipeline_mode = #tpu.pipeline_mode<synchronous>, transform_indices = @transform_5, window_bounds = array<i64: 128, 128>}, {pipeline_mode = #tpu.pipeline_mode<synchronous>, transform_indices = @transform_6, window_bounds = array<i64: 128, 1>}, {pipeline_mode = #tpu.pipeline_mode<synchronous>, transform_indices = @transform_7, window_bounds = array<i64: 1, 128>}, {transform_indices = @transform_8, window_bounds = array<i64: 32, 128>}]} {
    %c0 = arith.constant 0 : index
    %c0_0 = arith.constant 0 : index
    %0 = vector.load %arg1[%c0, %c0_0] : memref<32x128xf32, #tpu.memory_space<vmem>>, vector<32x128xf32>
    %c0_1 = arith.constant 0 : index
    %c0_2 = arith.constant 0 : index
    %1 = vector.load %arg3[%c0_1, %c0_2] : memref<128x128xf32, #tpu.memory_space<vmem>>, vector<128x128xf32>
    %c0_3 = arith.constant 0 : index
    %c0_4 = arith.constant 0 : index
    %2 = vector.load %arg4[%c0_3, %c0_4] : memref<128x1xf32, #tpu.memory_space<vmem>>, vector<128x1xf32>
    %c0_5 = arith.constant 0 : index
    %c0_6 = arith.constant 0 : index
    %3 = vector.load %arg5[%c0_5, %c0_6] : memref<1x128xf32, #tpu.memory_space<vmem>>, vector<1x128xf32>
    %cst = arith.constant dense<0.000000e+00> : vector<32x128xf32>
    %4 = tpu.matmul %0, %1, %cst {dimension_numbers = #tpu.dot_dimension_numbers<[1], [0], [0], [1], [0, 0, 1, 1], [], []>} : vector<32x128xf32>, vector<128x128xf32>, vector<32x128xf32> -> vector<32x128xf32>
    %cst_7 = arith.constant dense<0.000000e+00> : vector<32x1xf32>
    %5 = tpu.matmul %4, %2, %cst_7 {dimension_numbers = #tpu.dot_dimension_numbers<[1], [0], [0], [1], [0, 0, 1, 1], [], []>} : vector<32x128xf32>, vector<128x1xf32>, vector<32x1xf32> -> vector<32x1xf32>
    %6 = vector.extract_strided_slice %4 {offsets = [0, 0], sizes = [16, 128], strides = [1, 1]} : vector<32x128xf32> to vector<16x128xf32>
    %7 = vector.extract_strided_slice %5 {offsets = [0, 0], sizes = [16, 1], strides = [1, 1]} : vector<32x1xf32> to vector<16x1xf32>
    %cst_8 = arith.constant dense<0.000000e+00> : vector<1x16xf32>
    %8 = tpu.matmul %3, %6, %cst_8 {dimension_numbers = #tpu.dot_dimension_numbers<[1], [1], [0], [0], [0, 0, 1, 0], [], []>} : vector<1x128xf32>, vector<16x128xf32>, vector<1x16xf32> -> vector<1x16xf32>
    %9 = vector.broadcast %7 : vector<16x1xf32> to vector<16x16xf32>
    %10 = vector.broadcast %8 : vector<1x16xf32> to vector<16x16xf32>
    %11 = arith.addf %9, %10 : vector<16x16xf32>
    %cst_9 = arith.constant 2.000000e-01 : f32
    %12 = vector.broadcast %cst_9 : f32 to vector<16x16xf32>
    %13 = arith.mulf %12, %11 : vector<16x16xf32>
    %14 = arith.maximumf %11, %13 : vector<16x16xf32>
    %c0_10 = arith.constant 0 : index
    %c0_11 = arith.constant 0 : index
    %15 = vector.load %arg2[%c0_10, %c0_11] : memref<16x16xf32, #tpu.memory_space<vmem>>, vector<16x16xf32>
    %16 = arith.addf %14, %15 : vector<16x16xf32>
    %cst_12 = arith.constant dense<0xFF800000> : vector<16xf32>
    %17 = vector.multi_reduction <maximumf>, %16, %cst_12 [1] : vector<16x16xf32> to vector<16xf32>
    %18 = vector.shape_cast %17 : vector<16xf32> to vector<16x1xf32>
    %19 = vector.broadcast %18 : vector<16x1xf32> to vector<16x16xf32>
    %20 = arith.subf %16, %19 : vector<16x16xf32>
    %21 = math.exp %20 : vector<16x16xf32>
    %cst_13 = arith.constant dense<0.000000e+00> : vector<16xf32>
    %22 = vector.multi_reduction <add>, %21, %cst_13 [1] : vector<16x16xf32> to vector<16xf32>
    %23 = vector.shape_cast %22 : vector<16xf32> to vector<16x1xf32>
    %24 = tpu.reciprocal %23 : vector<16x1xf32> -> vector<16x1xf32>
    %cst_14 = arith.constant dense<0.000000e+00> : vector<16x128xf32>
    %25 = tpu.matmul %21, %6, %cst_14 {dimension_numbers = #tpu.dot_dimension_numbers<[1], [0], [0], [1], [0, 0, 1, 1], [], []>} : vector<16x16xf32>, vector<16x128xf32>, vector<16x128xf32> -> vector<16x128xf32>
    %26 = vector.broadcast %24 : vector<16x1xf32> to vector<16x128xf32>
    %27 = arith.mulf %25, %26 : vector<16x128xf32>
    %cst_15 = arith.constant 0.000000e+00 : f32
    %28 = vector.broadcast %cst_15 : f32 to vector<16x128xf32>
    %29 = arith.cmpf ogt, %27, %28 : vector<16x128xf32>
    %cst_16 = arith.constant 0.000000e+00 : f32
    %30 = vector.broadcast %cst_16 : f32 to vector<16x128xf32>
    %31 = arith.minimumf %27, %30 : vector<16x128xf32>
    %32 = math.exp %31 : vector<16x128xf32>
    %cst_17 = arith.constant 1.000000e+00 : f32
    %33 = vector.broadcast %cst_17 : f32 to vector<16x128xf32>
    %34 = arith.subf %32, %33 : vector<16x128xf32>
    %35 = arith.select %29, %27, %34 : vector<16x128xi1>, vector<16x128xf32>
    %36 = vector.extract_strided_slice %4 {offsets = [16, 0], sizes = [16, 128], strides = [1, 1]} : vector<32x128xf32> to vector<16x128xf32>
    %37 = vector.extract_strided_slice %5 {offsets = [16, 0], sizes = [16, 1], strides = [1, 1]} : vector<32x1xf32> to vector<16x1xf32>
    %cst_18 = arith.constant dense<0.000000e+00> : vector<1x16xf32>
    %38 = tpu.matmul %3, %36, %cst_18 {dimension_numbers = #tpu.dot_dimension_numbers<[1], [1], [0], [0], [0, 0, 1, 0], [], []>} : vector<1x128xf32>, vector<16x128xf32>, vector<1x16xf32> -> vector<1x16xf32>
    %39 = vector.broadcast %37 : vector<16x1xf32> to vector<16x16xf32>
    %40 = vector.broadcast %38 : vector<1x16xf32> to vector<16x16xf32>
    %41 = arith.addf %39, %40 : vector<16x16xf32>
    %cst_19 = arith.constant 2.000000e-01 : f32
    %42 = vector.broadcast %cst_19 : f32 to vector<16x16xf32>
    %43 = arith.mulf %42, %41 : vector<16x16xf32>
    %44 = arith.maximumf %41, %43 : vector<16x16xf32>
    %c0_20 = arith.constant 0 : index
    %c0_21 = arith.constant 0 : index
    %45 = vector.load %arg2[%c0_20, %c0_21] : memref<16x16xf32, #tpu.memory_space<vmem>>, vector<16x16xf32>
    %46 = arith.addf %44, %45 : vector<16x16xf32>
    %cst_22 = arith.constant dense<0xFF800000> : vector<16xf32>
    %47 = vector.multi_reduction <maximumf>, %46, %cst_22 [1] : vector<16x16xf32> to vector<16xf32>
    %48 = vector.shape_cast %47 : vector<16xf32> to vector<16x1xf32>
    %49 = vector.broadcast %48 : vector<16x1xf32> to vector<16x16xf32>
    %50 = arith.subf %46, %49 : vector<16x16xf32>
    %51 = math.exp %50 : vector<16x16xf32>
    %cst_23 = arith.constant dense<0.000000e+00> : vector<16xf32>
    %52 = vector.multi_reduction <add>, %51, %cst_23 [1] : vector<16x16xf32> to vector<16xf32>
    %53 = vector.shape_cast %52 : vector<16xf32> to vector<16x1xf32>
    %54 = tpu.reciprocal %53 : vector<16x1xf32> -> vector<16x1xf32>
    %cst_24 = arith.constant dense<0.000000e+00> : vector<16x128xf32>
    %55 = tpu.matmul %51, %36, %cst_24 {dimension_numbers = #tpu.dot_dimension_numbers<[1], [0], [0], [1], [0, 0, 1, 1], [], []>} : vector<16x16xf32>, vector<16x128xf32>, vector<16x128xf32> -> vector<16x128xf32>
    %56 = vector.broadcast %54 : vector<16x1xf32> to vector<16x128xf32>
    %57 = arith.mulf %55, %56 : vector<16x128xf32>
    %cst_25 = arith.constant 0.000000e+00 : f32
    %58 = vector.broadcast %cst_25 : f32 to vector<16x128xf32>
    %59 = arith.cmpf ogt, %57, %58 : vector<16x128xf32>
    %cst_26 = arith.constant 0.000000e+00 : f32
    %60 = vector.broadcast %cst_26 : f32 to vector<16x128xf32>
    %61 = arith.minimumf %57, %60 : vector<16x128xf32>
    %62 = math.exp %61 : vector<16x128xf32>
    %cst_27 = arith.constant 1.000000e+00 : f32
    %63 = vector.broadcast %cst_27 : f32 to vector<16x128xf32>
    %64 = arith.subf %62, %63 : vector<16x128xf32>
    %65 = arith.select %59, %57, %64 : vector<16x128xi1>, vector<16x128xf32>
    %66 = tpu.concatenate %35, %65 in 0 : vector<16x128xf32>, vector<16x128xf32> -> vector<32x128xf32>
    %c0_28 = arith.constant 0 : index
    %c0_29 = arith.constant 0 : index
    %67 = vector.load %arg6[%c0_28, %c0_29] : memref<128x128xf32, #tpu.memory_space<vmem>>, vector<128x128xf32>
    %c0_30 = arith.constant 0 : index
    %c0_31 = arith.constant 0 : index
    %68 = vector.load %arg7[%c0_30, %c0_31] : memref<128x1xf32, #tpu.memory_space<vmem>>, vector<128x1xf32>
    %c0_32 = arith.constant 0 : index
    %c0_33 = arith.constant 0 : index
    %69 = vector.load %arg8[%c0_32, %c0_33] : memref<1x128xf32, #tpu.memory_space<vmem>>, vector<1x128xf32>
    %cst_34 = arith.constant dense<0.000000e+00> : vector<32x128xf32>
    %70 = tpu.matmul %66, %67, %cst_34 {dimension_numbers = #tpu.dot_dimension_numbers<[1], [0], [0], [1], [0, 0, 1, 1], [], []>} : vector<32x128xf32>, vector<128x128xf32>, vector<32x128xf32> -> vector<32x128xf32>
    %cst_35 = arith.constant dense<0.000000e+00> : vector<32x1xf32>
    %71 = tpu.matmul %70, %68, %cst_35 {dimension_numbers = #tpu.dot_dimension_numbers<[1], [0], [0], [1], [0, 0, 1, 1], [], []>} : vector<32x128xf32>, vector<128x1xf32>, vector<32x1xf32> -> vector<32x1xf32>
    %72 = vector.extract_strided_slice %70 {offsets = [0, 0], sizes = [16, 128], strides = [1, 1]} : vector<32x128xf32> to vector<16x128xf32>
    %73 = vector.extract_strided_slice %71 {offsets = [0, 0], sizes = [16, 1], strides = [1, 1]} : vector<32x1xf32> to vector<16x1xf32>
    %cst_36 = arith.constant dense<0.000000e+00> : vector<1x16xf32>
    %74 = tpu.matmul %69, %72, %cst_36 {dimension_numbers = #tpu.dot_dimension_numbers<[1], [1], [0], [0], [0, 0, 1, 0], [], []>} : vector<1x128xf32>, vector<16x128xf32>, vector<1x16xf32> -> vector<1x16xf32>
    %75 = vector.broadcast %73 : vector<16x1xf32> to vector<16x16xf32>
    %76 = vector.broadcast %74 : vector<1x16xf32> to vector<16x16xf32>
    %77 = arith.addf %75, %76 : vector<16x16xf32>
    %cst_37 = arith.constant 2.000000e-01 : f32
    %78 = vector.broadcast %cst_37 : f32 to vector<16x16xf32>
    %79 = arith.mulf %78, %77 : vector<16x16xf32>
    %80 = arith.maximumf %77, %79 : vector<16x16xf32>
    %cst_38 = arith.constant dense<0xFF800000> : vector<16xf32>
    %81 = vector.multi_reduction <maximumf>, %80, %cst_38 [1] : vector<16x16xf32> to vector<16xf32>
    %82 = vector.shape_cast %81 : vector<16xf32> to vector<16x1xf32>
    %83 = vector.broadcast %82 : vector<16x1xf32> to vector<16x16xf32>
    %84 = arith.subf %80, %83 : vector<16x16xf32>
    %85 = math.exp %84 : vector<16x16xf32>
    %cst_39 = arith.constant dense<0.000000e+00> : vector<16xf32>
    %86 = vector.multi_reduction <add>, %85, %cst_39 [1] : vector<16x16xf32> to vector<16xf32>
    %87 = vector.shape_cast %86 : vector<16xf32> to vector<16x1xf32>
    %88 = tpu.reciprocal %87 : vector<16x1xf32> -> vector<16x1xf32>
    %cst_40 = arith.constant dense<0.000000e+00> : vector<16x128xf32>
    %89 = tpu.matmul %85, %72, %cst_40 {dimension_numbers = #tpu.dot_dimension_numbers<[1], [0], [0], [1], [0, 0, 1, 1], [], []>} : vector<16x16xf32>, vector<16x128xf32>, vector<16x128xf32> -> vector<16x128xf32>
    %90 = vector.broadcast %88 : vector<16x1xf32> to vector<16x128xf32>
    %91 = arith.mulf %89, %90 : vector<16x128xf32>
    %cst_41 = arith.constant 0.000000e+00 : f32
    %92 = vector.broadcast %cst_41 : f32 to vector<16x128xf32>
    %93 = arith.cmpf ogt, %91, %92 : vector<16x128xf32>
    %cst_42 = arith.constant 0.000000e+00 : f32
    %94 = vector.broadcast %cst_42 : f32 to vector<16x128xf32>
    %95 = arith.minimumf %91, %94 : vector<16x128xf32>
    %96 = math.exp %95 : vector<16x128xf32>
    %cst_43 = arith.constant 1.000000e+00 : f32
    %97 = vector.broadcast %cst_43 : f32 to vector<16x128xf32>
    %98 = arith.subf %96, %97 : vector<16x128xf32>
    %99 = arith.select %93, %91, %98 : vector<16x128xi1>, vector<16x128xf32>
    %100 = vector.extract_strided_slice %70 {offsets = [16, 0], sizes = [16, 128], strides = [1, 1]} : vector<32x128xf32> to vector<16x128xf32>
    %101 = vector.extract_strided_slice %71 {offsets = [16, 0], sizes = [16, 1], strides = [1, 1]} : vector<32x1xf32> to vector<16x1xf32>
    %cst_44 = arith.constant dense<0.000000e+00> : vector<1x16xf32>
    %102 = tpu.matmul %69, %100, %cst_44 {dimension_numbers = #tpu.dot_dimension_numbers<[1], [1], [0], [0], [0, 0, 1, 0], [], []>} : vector<1x128xf32>, vector<16x128xf32>, vector<1x16xf32> -> vector<1x16xf32>
    %103 = vector.broadcast %101 : vector<16x1xf32> to vector<16x16xf32>
    %104 = vector.broadcast %102 : vector<1x16xf32> to vector<16x16xf32>
    %105 = arith.addf %103, %104 : vector<16x16xf32>
    %cst_45 = arith.constant 2.000000e-01 : f32
    %106 = vector.broadcast %cst_45 : f32 to vector<16x16xf32>
    %107 = arith.mulf %106, %105 : vector<16x16xf32>
    %108 = arith.maximumf %105, %107 : vector<16x16xf32>
    %cst_46 = arith.constant dense<0xFF800000> : vector<16xf32>
    %109 = vector.multi_reduction <maximumf>, %108, %cst_46 [1] : vector<16x16xf32> to vector<16xf32>
    %110 = vector.shape_cast %109 : vector<16xf32> to vector<16x1xf32>
    %111 = vector.broadcast %110 : vector<16x1xf32> to vector<16x16xf32>
    %112 = arith.subf %108, %111 : vector<16x16xf32>
    %113 = math.exp %112 : vector<16x16xf32>
    %cst_47 = arith.constant dense<0.000000e+00> : vector<16xf32>
    %114 = vector.multi_reduction <add>, %113, %cst_47 [1] : vector<16x16xf32> to vector<16xf32>
    %115 = vector.shape_cast %114 : vector<16xf32> to vector<16x1xf32>
    %116 = tpu.reciprocal %115 : vector<16x1xf32> -> vector<16x1xf32>
    %cst_48 = arith.constant dense<0.000000e+00> : vector<16x128xf32>
    %117 = tpu.matmul %113, %100, %cst_48 {dimension_numbers = #tpu.dot_dimension_numbers<[1], [0], [0], [1], [0, 0, 1, 1], [], []>} : vector<16x16xf32>, vector<16x128xf32>, vector<16x128xf32> -> vector<16x128xf32>
    %118 = vector.broadcast %116 : vector<16x1xf32> to vector<16x128xf32>
    %119 = arith.mulf %117, %118 : vector<16x128xf32>
    %cst_49 = arith.constant 0.000000e+00 : f32
    %120 = vector.broadcast %cst_49 : f32 to vector<16x128xf32>
    %121 = arith.cmpf ogt, %119, %120 : vector<16x128xf32>
    %cst_50 = arith.constant 0.000000e+00 : f32
    %122 = vector.broadcast %cst_50 : f32 to vector<16x128xf32>
    %123 = arith.minimumf %119, %122 : vector<16x128xf32>
    %124 = math.exp %123 : vector<16x128xf32>
    %cst_51 = arith.constant 1.000000e+00 : f32
    %125 = vector.broadcast %cst_51 : f32 to vector<16x128xf32>
    %126 = arith.subf %124, %125 : vector<16x128xf32>
    %127 = arith.select %121, %119, %126 : vector<16x128xi1>, vector<16x128xf32>
    %128 = tpu.concatenate %99, %127 in 0 : vector<16x128xf32>, vector<16x128xf32> -> vector<32x128xf32>
    %c0_52 = arith.constant 0 : index
    %c0_53 = arith.constant 0 : index
    %129 = vector.load %arg9[%c0_52, %c0_53] : memref<32x128xf32, #tpu.memory_space<vmem>>, vector<32x128xf32>
    tpu.vector_store %arg9[%c0_52, %c0_53], %128 {strides = array<i32>} : memref<32x128xf32, #tpu.memory_space<vmem>>, vector<32x128xf32>,
    return
  }
  func.func @transform_0(%arg0: i32) -> (i32, i32) {
    %c0_i32 = arith.constant 0 : i32
    %c0_i32_0 = arith.constant 0 : i32
    return %arg0, %c0_i32 : i32, i32
  }
  func.func @transform_1(%arg0: i32) -> (i32, i32) {
    %c0_i32 = arith.constant 0 : i32
    %c0_i32_0 = arith.constant 0 : i32
    %c0_i32_1 = arith.constant 0 : i32
    return %c0_i32, %c0_i32_0 : i32, i32
  }
  func.func @transform_2(%arg0: i32) -> (i32, i32) {
    %c0_i32 = arith.constant 0 : i32
    %c0_i32_0 = arith.constant 0 : i32
    %c0_i32_1 = arith.constant 0 : i32
    return %c0_i32, %c0_i32_0 : i32, i32
  }
  func.func @transform_3(%arg0: i32) -> (i32, i32) {
    %c0_i32 = arith.constant 0 : i32
    %c0_i32_0 = arith.constant 0 : i32
    %c0_i32_1 = arith.constant 0 : i32
    return %c0_i32, %c0_i32_0 : i32, i32
  }
  func.func @transform_4(%arg0: i32) -> (i32, i32) {
    %c0_i32 = arith.constant 0 : i32
    %c0_i32_0 = arith.constant 0 : i32
    %c0_i32_1 = arith.constant 0 : i32
    return %c0_i32, %c0_i32_0 : i32, i32
  }
  func.func @transform_5(%arg0: i32) -> (i32, i32) {
    %c0_i32 = arith.constant 0 : i32
    %c0_i32_0 = arith.constant 0 : i32
    %c0_i32_1 = arith.constant 0 : i32
    return %c0_i32, %c0_i32_0 : i32, i32
  }
  func.func @transform_6(%arg0: i32) -> (i32, i32) {
    %c0_i32 = arith.constant 0 : i32
    %c0_i32_0 = arith.constant 0 : i32
    %c0_i32_1 = arith.constant 0 : i32
    return %c0_i32, %c0_i32_0 : i32, i32
  }
  func.func @transform_7(%arg0: i32) -> (i32, i32) {
    %c0_i32 = arith.constant 0 : i32
    %c0_i32_0 = arith.constant 0 : i32
    %c0_i32_1 = arith.constant 0 : i32
    return %c0_i32, %c0_i32_0 : i32, i32
  }
  func.func @transform_8(%arg0: i32) -> (i32, i32) {
    %c0_i32 = arith.constant 0 : i32
    %c0_i32_0 = arith.constant 0 : i32
    return %arg0, %c0_i32 : i32, i32
  }
}

</mosaic_0001>

<llo_original>
// kernel: stgat_forward.1
$region0: #{stgat_forward.1}
  #allocation0 [shape = 'u32[]', space=smem, size = 0x4, offset = 0x4, fixed_abs, tag = 'smem constant byte address 0x4 - core index']
  #allocation1 [shape = 'u32[144,128]{1,0:T(1,128)}', space=vmem, size = 0x12000, scoped, tag = 'internal scratch']
  %s0 = inlined_call_operand.vmem [shape: f32[32,128], index: 0, kind: input, shape index: {}]
  %s1 = inlined_call_operand.vmem [shape: f32[16,16], index: 1, kind: input, shape index: {}]
  %s2 = inlined_call_operand.vmem [shape: f32[128,128], index: 2, kind: input, shape index: {}]
  %s3 = inlined_call_operand.vmem [shape: f32[128,1], index: 3, kind: input, shape index: {}]
  %s4 = inlined_call_operand.vmem [shape: f32[1,128], index: 4, kind: input, shape index: {}]
  %s5 = inlined_call_operand.vmem [shape: f32[128,128], index: 5, kind: input, shape index: {}]
  %s6 = inlined_call_operand.vmem [shape: f32[128,1], index: 6, kind: input, shape index: {}]
  %s7 = inlined_call_operand.vmem [shape: f32[1,128], index: 7, kind: input, shape index: {}]
  %s8 = inlined_call_operand.vmem [shape: f32[32,128], index: 8, kind: output, shape index: {}]
  %s9 = sld [smem:[#allocation0]]
  $region42: #{stgat_forward.1} parent=0
    _
  %s11 = ssub.s32 1, %s9
  %s12 = scalar_select 0, %s11, %s9
  // Predicated region
  $region2: #{stgat_forward.1} parent=0 // pred_check
    _
  $region3: #{stgat_forward.1} parent=0 // pred_check_branch
    %14 = sbr.rel (0) target = $region5
  $region4: #{stgat_forward.1} parent=0 // pred_region
    _
  $region5: #{stgat_forward.1} parent=0 // pred_fallthru
    _
  // Predicated region
  $region6: #{stgat_forward.1} parent=0 // pred_check
    _
  $region7: #{stgat_forward.1} parent=0 // pred_check_branch
    %16 = sbr.rel (0) target = $region9
  $region8: #{stgat_forward.1} parent=0 // pred_region
    _
  $region9: #{stgat_forward.1} parent=0 // pred_fallthru
    _
  // Predicated region
  $region10: #{stgat_forward.1} parent=0 // pred_check
    _
  $region11: #{stgat_forward.1} parent=0 // pred_check_branch
    %18 = sbr.rel (0) target = $region13
  $region12: #{stgat_forward.1} parent=0 // pred_region
    _
  $region13: #{stgat_forward.1} parent=0 // pred_fallthru
    _
  // Predicated region
  $region14: #{stgat_forward.1} parent=0 // pred_check
    _
  $region15: #{stgat_forward.1} parent=0 // pred_check_branch
    %20 = sbr.rel (0) target = $region17
  $region16: #{stgat_forward.1} parent=0 // pred_region
    _
  $region17: #{stgat_forward.1} parent=0 // pred_fallthru
    _
  // Predicated region
  $region18: #{stgat_forward.1} parent=0 // pred_check
    _
  $region19: #{stgat_forward.1} parent=0 // pred_check_branch
    %22 = sbr.rel (0) target = $region21
  $region20: #{stgat_forward.1} parent=0 // pred_region
    _
  $region21: #{stgat_forward.1} parent=0 // pred_fallthru
    _
  // Predicated region
  $region22: #{stgat_forward.1} parent=0 // pred_check
    _
  $region23: #{stgat_forward.1} parent=0 // pred_check_branch
    %24 = sbr.rel (0) target = $region25
  $region24: #{stgat_forward.1} parent=0 // pred_region
    _
  $region25: #{stgat_forward.1} parent=0 // pred_fallthru
    _
  // Predicated region
  $region26: #{stgat_forward.1} parent=0 // pred_check
    _
  $region27: #{stgat_forward.1} parent=0 // pred_check_branch
    %26 = sbr.rel (0) target = $region29
  $region28: #{stgat_forward.1} parent=0 // pred_region
    _
  $region29: #{stgat_forward.1} parent=0 // pred_fallthru
    _
  // Predicated region
  $region30: #{stgat_forward.1} parent=0 // pred_check
    _
  $region31: #{stgat_forward.1} parent=0 // pred_check_branch
    %28 = sbr.rel (0) target = $region33
  $region32: #{stgat_forward.1} parent=0 // pred_region
    _
  $region33: #{stgat_forward.1} parent=0 // pred_fallthru
    _
  %v29 = vld [vmem:[%s0] sm:$0xff]
  %v30 = vld [vmem:[%s0 + $0x8] sm:$0xff]
  %v31 = vld [vmem:[%s0 + $0x10] sm:$0xff]
  %v32 = vld [vmem:[%s0 + $0x18] sm:$0xff]
  %v33 = vld [vmem:[%s2] sm:$0xff]
  %v34 = vld [vmem:[%s2 + $0x8] sm:$0xff]
  %v35 = vld [vmem:[%s2 + $0x10] sm:$0xff]
  %v36 = vld [vmem:[%s2 + $0x18] sm:$0xff]
  %v37 = vld [vmem:[%s2 + $0x20] sm:$0xff]
  %v38 = vld [vmem:[%s2 + $0x28] sm:$0xff]
  %v39 = vld [vmem:[%s2 + $0x30] sm:$0xff]
  %v40 = vld [vmem:[%s2 + $0x38] sm:$0xff]
  %v41 = vld [vmem:[%s2 + $0x40] sm:$0xff]
  %v42 = vld [vmem:[%s2 + $0x48] sm:$0xff]
  %v43 = vld [vmem:[%s2 + $0x50] sm:$0xff]
  %v44 = vld [vmem:[%s2 + $0x58] sm:$0xff]
  %v45 = vld [vmem:[%s2 + $0x60] sm:$0xff]
  %v46 = vld [vmem:[%s2 + $0x68] sm:$0xff]
  %v47 = vld [vmem:[%s2 + $0x70] sm:$0xff]
  %v48 = vld [vmem:[%s2 + $0x78] sm:$0xff]
  %v49 = vld [vmem:[%s3] sm:$0xff]
  %v50 = vld [vmem:[%s3 + $0x8] sm:$0xff]
  %v51 = vld [vmem:[%s3 + $0x10] sm:$0xff]
  %v52 = vld [vmem:[%s3 + $0x18] sm:$0xff]
  %v53 = vld [vmem:[%s3 + $0x20] sm:$0xff]
  %v54 = vld [vmem:[%s3 + $0x28] sm:$0xff]
  %v55 = vld [vmem:[%s3 + $0x30] sm:$0xff]
  %v56 = vld [vmem:[%s3 + $0x38] sm:$0xff]
  %v57 = vld [vmem:[%s3 + $0x40] sm:$0xff]
  %v58 = vld [vmem:[%s3 + $0x48] sm:$0xff]
  %v59 = vld [vmem:[%s3 + $0x50] sm:$0xff]
  %v60 = vld [vmem:[%s3 + $0x58] sm:$0xff]
  %v61 = vld [vmem:[%s3 + $0x60] sm:$0xff]
  %v62 = vld [vmem:[%s3 + $0x68] sm:$0xff]
  %v63 = vld [vmem:[%s3 + $0x70] sm:$0xff]
  %v64 = vld [vmem:[%s3 + $0x78] sm:$0xff]
  %v65 = vld [vmem:[%s4] sm:$0x1]
  %66 = vmatprep.subr.mxu0 0.0
  %67 = vmatpush1.msra.mxu0 %v48
  %68 = vmatprep.subr.mxu0 0.0
  %69 = vmatpush1.msra.mxu0 %v47
  %70 = vmatprep.subr.mxu0 0.0
  %71 = vmatpush1.msra.mxu0 %v46
  %72 = vmatprep.subr.mxu0 0.0
  %73 = vmatpush1.msra.mxu0 %v45
  %74 = vmatprep.subr.mxu0 0.0
  %75 = vmatpush1.msra.mxu0 %v44
  %76 = vmatprep.subr.mxu0 0.0
  %77 = vmatpush1.msra.mxu0 %v43
  %78 = vmatprep.subr.mxu0 0.0
  %79 = vmatpush1.msra.mxu0 %v42
  %80 = vmatprep.subr.mxu0 0.0
  %81 = vmatpush1.msra.mxu0 %v41
  %82 = vmatprep.subr.mxu0 0.0
  %83 = vmatpush1.msra.mxu0 %v40
  %84 = vmatprep.subr.mxu0 0.0
  %85 = vmatpush1.msra.mxu0 %v39
  %86 = vmatprep.subr.mxu0 0.0
  %87 = vmatpush1.msra.mxu0 %v38
  %88 = vmatprep.subr.mxu0 0.0
  %89 = vmatpush1.msra.mxu0 %v37
  %90 = vmatprep.subr.mxu0 0.0
  %91 = vmatpush1.msra.mxu0 %v36
  %92 = vmatprep.subr.mxu0 0.0
  %93 = vmatpush1.msra.mxu0 %v35
  %94 = vmatprep.subr.mxu0 0.0
  %95 = vmatpush1.msra.mxu0 %v34
  %96 = vmatprep.subr.mxu0 0.0
  %97 = vmatpush1.msra.mxu0 %v33
  %98 = vmatprep.subr.mxu0 0.0
  %99 = vmatpush2.msra.mxu0 0.0
  %100 = vmatprep.subr.mxu0 0.0
  %101 = vmatpush2.msra.mxu0 0.0
  %102 = vmatprep.subr.mxu0 0.0
  %103 = vmatpush2.msra.mxu0 0.0
  %104 = vmatprep.subr.mxu0 0.0
  %105 = vmatpush2.msra.mxu0 0.0
  %106 = vmatprep.subr.mxu0 0.0
  %107 = vmatpush2.msra.mxu0 0.0
  %108 = vmatprep.subr.mxu0 0.0
  %109 = vmatpush2.msra.mxu0 0.0
  %110 = vmatprep.subr.mxu0 0.0
  %111 = vmatpush2.msra.mxu0 0.0
  %112 = vmatprep.subr.mxu0 0.0
  %113 = vmatpush2.msra.mxu0 0.0
  %114 = vmatprep.subr.mxu0 0.0
  %115 = vmatpush2.msra.mxu0 0.0
  %116 = vmatprep.subr.mxu0 0.0
  %117 = vmatpush2.msra.mxu0 0.0
  %118 = vmatprep.subr.mxu0 0.0
  %119 = vmatpush2.msra.mxu0 0.0
  %120 = vmatprep.subr.mxu0 0.0
  %121 = vmatpush2.msra.mxu0 0.0
  %122 = vmatprep.subr.mxu0 0.0
  %123 = vmatpush2.msra.mxu0 0.0
  %124 = vmatprep.subr.mxu0 0.0
  %125 = vmatpush2.msra.mxu0 0.0
  %126 = vmatprep.subr.mxu0 0.0
  %127 = vmatpush2.msra.mxu0 0.0
  %128 = vmatprep.subr.mxu0 0.0
  %129 = vmatpush2.msra.mxu0 0.0
  %130 = vmatprep.mubr.f32.mxu0 0.0
  %131 = vmatmul.mubr.f32.gmra.mxu0 %v29
  %v132 = vpop.f32.mrf.mxu0
  %v133 = vadd.f32 0.0, %v132
  %v134 = vpop.f32.mrf.mxu0
  %135 = vmatprep.mubr.f32.mxu0 0.0
  %136 = vmatmul.mubr.f32.gmra.mxu0 %v30
  %v137 = vpop.f32.mrf.mxu0
  %v138 = vadd.f32 0.0, %v137
  %v139 = vpop.f32.mrf.mxu0
  %140 = vmatprep.mubr.f32.mxu0 0.0
  %141 = vmatmul.mubr.f32.gmra.mxu0 %v31
  %v142 = vpop.f32.mrf.mxu0
  %v143 = vadd.f32 0.0, %v142
  %v144 = vpop.f32.mrf.mxu0
  %145 = vmatprep.mubr.f32.mxu0 0.0
  %146 = vmatmul.mubr.f32.gmra.mxu0 %v32
  %v147 = vpop.f32.mrf.mxu0
  %v148 = vadd.f32 0.0, %v147
  %v149 = vpop.f32.mrf.mxu0
  %150 = vdwg.mxu0
  %151 = vmatprep.subr.mxu0 0.0
  %152 = vmatpush1.msra.mxu0 %v64
  %153 = vmatprep.subr.mxu0 0.0
  %154 = vmatpush1.msra.mxu0 %v63
  %155 = vmatprep.subr.mxu0 0.0
  %156 = vmatpush1.msra.mxu0 %v62
  %157 = vmatprep.subr.mxu0 0.0
  %158 = vmatpush1.msra.mxu0 %v61
  %159 = vmatprep.subr.mxu0 0.0
  %160 = vmatpush1.msra.mxu0 %v60
  %161 = vmatprep.subr.mxu0 0.0
  %162 = vmatpush1.msra.mxu0 %v59
  %163 = vmatprep.subr.mxu0 0.0
  %164 = vmatpush1.msra.mxu0 %v58
  %165 = vmatprep.subr.mxu0 0.0
  %166 = vmatpush1.msra.mxu0 %v57
  %167 = vmatprep.subr.mxu0 0.0
  %168 = vmatpush1.msra.mxu0 %v56
  %169 = vmatprep.subr.mxu0 0.0
  %170 = vmatpush1.msra.mxu0 %v55
  %171 = vmatprep.subr.mxu0 0.0
  %172 = vmatpush1.msra.mxu0 %v54
  %173 = vmatprep.subr.mxu0 0.0
  %174 = vmatpush1.msra.mxu0 %v53
  %175 = vmatprep.subr.mxu0 0.0
  %176 = vmatpush1.msra.mxu0 %v52
  %177 = vmatprep.subr.mxu0 0.0
  %178 = vmatpush1.msra.mxu0 %v51
  %179 = vmatprep.subr.mxu0 0.0
  %180 = vmatpush1.msra.mxu0 %v50
  %181 = vmatprep.subr.mxu0 0.0
  %182 = vmatpush1.msra.mxu0 %v49
  %183 = vmatprep.subr.mxu0 0.0
  %184 = vmatpush2.msra.mxu0 0.0
  %185 = vmatprep.subr.mxu0 0.0
  %186 = vmatpush2.msra.mxu0 0.0
  %187 = vmatprep.subr.mxu0 0.0
  %188 = vmatpush2.msra.mxu0 0.0
  %189 = vmatprep.subr.mxu0 0.0
  %190 = vmatpush2.msra.mxu0 0.0
  %191 = vmatprep.subr.mxu0 0.0
  %192 = vmatpush2.msra.mxu0 0.0
  %193 = vmatprep.subr.mxu0 0.0
  %194 = vmatpush2.msra.mxu0 0.0
  %195 = vmatprep.subr.mxu0 0.0
  %196 = vmatpush2.msra.mxu0 0.0
  %197 = vmatprep.subr.mxu0 0.0
  %198 = vmatpush2.msra.mxu0 0.0
  %199 = vmatprep.subr.mxu0 0.0
  %200 = vmatpush2.msra.mxu0 0.0
  %201 = vmatprep.subr.mxu0 0.0
  %202 = vmatpush2.msra.mxu0 0.0
  %203 = vmatprep.subr.mxu0 0.0
  %204 = vmatpush2.msra.mxu0 0.0
  %205 = vmatprep.subr.mxu0 0.0
  %206 = vmatpush2.msra.mxu0 0.0
  %207 = vmatprep.subr.mxu0 0.0
  %208 = vmatpush2.msra.mxu0 0.0
  %209 = vmatprep.subr.mxu0 0.0
  %210 = vmatpush2.msra.mxu0 0.0
  %211 = vmatprep.subr.mxu0 0.0
  %212 = vmatpush2.msra.mxu0 0.0
  %213 = vmatprep.subr.mxu0 0.0
  %214 = vmatpush2.msra.mxu0 0.0
  %215 = vmatprep.mubr.f32.mxu0 0.0
  %216 = vmatmul.mubr.f32.gmra.mxu0 %v133
  %v217 = vpop.f32.mrf.mxu0
  %v218 = vadd.f32 0.0, %v217
  %v219 = vpop.f32.mrf.mxu0
  %220 = vmatprep.mubr.f32.mxu0 0.0
  %221 = vmatmul.mubr.f32.gmra.mxu0 %v138
  %v222 = vpop.f32.mrf.mxu0
  %v223 = vadd.f32 0.0, %v222
  %v224 = vpop.f32.mrf.mxu0
  %225 = vmatprep.mubr.f32.mxu0 0.0
  %226 = vmatmul.mubr.f32.gmra.mxu0 %v143
  %v227 = vpop.f32.mrf.mxu0
  %v228 = vadd.f32 0.0, %v227
  %v229 = vpop.f32.mrf.mxu0
  %230 = vmatprep.mubr.f32.mxu0 0.0
  %231 = vmatmul.mubr.f32.gmra.mxu0 %v148
  %v232 = vpop.f32.mrf.mxu0
  %v233 = vadd.f32 0.0, %v232
  %v234 = vpop.f32.mrf.mxu0
  %235 = vdwg.mxu0
  %236 = vmatprep.subr.mxu0 0.0
  %237 = vmatpush1.xpose.msra.mxu0 0.0
  %238 = vmatprep.subr.mxu0 0.0
  %239 = vmatpush1.xpose.msra.mxu0 0.0
  %240 = vmatprep.subr.mxu0 0.0
  %241 = vmatpush1.xpose.msra.mxu0 0.0
  %242 = vmatprep.subr.mxu0 0.0
  %243 = vmatpush1.xpose.msra.mxu0 0.0
  %244 = vmatprep.subr.mxu0 0.0
  %245 = vmatpush1.xpose.msra.mxu0 0.0
  %246 = vmatprep.subr.mxu0 0.0
  %247 = vmatpush1.xpose.msra.mxu0 0.0
  %248 = vmatprep.subr.mxu0 0.0
  %249 = vmatpush1.xpose.msra.mxu0 0.0
  %250 = vmatprep.subr.mxu0 0.0
  %251 = vmatpush1.xpose.msra.mxu0 0.0
  %252 = vmatprep.subr.mxu0 0.0
  %253 = vmatpush1.xpose.msra.mxu0 0.0
  %254 = vmatprep.subr.mxu0 0.0
  %255 = vmatpush1.xpose.msra.mxu0 0.0
  %256 = vmatprep.subr.mxu0 0.0
  %257 = vmatpush1.xpose.msra.mxu0 0.0
  %258 = vmatprep.subr.mxu0 0.0
  %259 = vmatpush1.xpose.msra.mxu0 0.0
  %260 = vmatprep.subr.mxu0 0.0
  %261 = vmatpush1.xpose.msra.mxu0 0.0
  %262 = vmatprep.subr.mxu0 0.0
  %263 = vmatpush1.xpose.msra.mxu0 0.0
  %264 = vmatprep.subr.mxu0 0.0
  %265 = vmatpush1.xpose.msra.mxu0 %v138
  %266 = vmatprep.subr.mxu0 0.0
  %267 = vmatpush1.xpose.msra.mxu0 %v133
  %268 = vmatprep.subr.mxu0 0.0
  %269 = vmatpush2.xpose.msra.mxu0 0.0
  %270 = vmatprep.subr.mxu0 0.0
  %271 = vmatpush2.xpose.msra.mxu0 0.0
  %272 = vmatprep.subr.mxu0 0.0
  %273 = vmatpush2.xpose.msra.mxu0 0.0
  %274 = vmatprep.subr.mxu0 0.0
  %275 = vmatpush2.xpose.msra.mxu0 0.0
  %276 = vmatprep.subr.mxu0 0.0
  %277 = vmatpush2.xpose.msra.mxu0 0.0
  %278 = vmatprep.subr.mxu0 0.0
  %279 = vmatpush2.xpose.msra.mxu0 0.0
  %280 = vmatprep.subr.mxu0 0.0
  %281 = vmatpush2.xpose.msra.mxu0 0.0
  %282 = vmatprep.subr.mxu0 0.0
  %283 = vmatpush2.xpose.msra.mxu0 0.0
  %284 = vmatprep.subr.mxu0 0.0
  %285 = vmatpush2.xpose.msra.mxu0 0.0
  %286 = vmatprep.subr.mxu0 0.0
  %287 = vmatpush2.xpose.msra.mxu0 0.0
  %288 = vmatprep.subr.mxu0 0.0
  %289 = vmatpush2.xpose.msra.mxu0 0.0
  %290 = vmatprep.subr.mxu0 0.0
  %291 = vmatpush2.xpose.msra.mxu0 0.0
  %292 = vmatprep.subr.mxu0 0.0
  %293 = vmatpush2.xpose.msra.mxu0 0.0
  %294 = vmatprep.subr.mxu0 0.0
  %295 = vmatpush2.xpose.msra.mxu0 0.0
  %296 = vmatprep.subr.mxu0 0.0
  %297 = vmatpush2.xpose.msra.mxu0 0.0
  %298 = vmatprep.subr.mxu0 0.0
  %299 = vmatpush2.xpose.msra.mxu0 0.0
  %300 = vmatprep.mubr.f32.mxu0 0.0
  %301 = vmatmul.mubr.f32.gmra.mxu0 %v65
  %v302 = vpop.f32.mrf.mxu0
  %v303 = vadd.f32 0.0, %v302
  %v304 = vpop.f32.mrf.mxu0
  %305 = vdwg.mxu0
  %307 = vset.pattern.permute.xlu0 0
  %308 = vperm.xlu0 %307, %v218
  %v309 = vpop.permute.xlu0 %308
  %312 = vset.pattern.permute.xlu0 0
  %313 = vperm.xlu0 %312, %v223
  %v314 = vpop.permute.xlu0 %313
  %v316 = vlaneseq
  %v317 = vshrl.u32 %v316, 7
  %v318 = vsub.s32 0, %v317
  %v319 = vrot.slane %v303, %v318
  %v320 = vadd.f32 %v309, %v319
  %v321 = vadd.f32 %v314, %v319
  %v322 = vmul.f32 %v320, 0.2
  %v323 = vmul.f32 %v321, 0.2
  %v324 = vmax.f32 %v320, %v322
  %v325 = vmax.f32 %v321, %v323
  %v326 = vld [vmem:[%s1] sm:$0xff]
  %v327 = vld [vmem:[%s1 + $0x8] sm:$0xff]
  %v328 = vadd.f32 %v324, %v326
  %v329 = vadd.f32 %v325, %v327
  %vm330 = vcmask 130048
  %v331 = vsel %vm330, %v328, -inf
  %332 = vmax.xlane.f32.xlu0 %v331
  %v333 = vpop.xlane.xlu0 %332
  %v334 = vsel %vm330, %v329, -inf
  %335 = vmax.xlane.f32.xlu0 %v334
  %v336 = vpop.xlane.xlu0 %335
  %v337 = vsub.f32 %v328, %v333
  %v338 = vsub.f32 %v329, %v336
  %v339 = vmul.f32 %v337, 1.442695
  %v340 = vpow.pop %v339
  %v341 = vmul.f32 %v338, 1.442695
  %v342 = vpow.pop %v341
  %v343 = vsel %vm330, %v340, 0.0
  %344 = vadd.xlane.f32.xlu0 %v343
  %v345 = vpop.xlane.xlu0 %344
  %v346 = vsel %vm330, %v342, 0.0
  %347 = vadd.xlane.f32.xlu0 %v346
  %v348 = vpop.xlane.xlu0 %347
  %v349 = vrcp.pop %v345
  %v350 = vrcp.pop %v348
  %v352 = vsel %vm330, %v340, 0
  %v355 = vsel %vm330, %v342, 0
  %357 = vmatprep.subr.mxu0 0.0
  %358 = vmatpush1.msra.mxu0 0.0
  %359 = vmatprep.subr.mxu0 0.0
  %360 = vmatpush1.msra.mxu0 0.0
  %361 = vmatprep.subr.mxu0 0.0
  %362 = vmatpush1.msra.mxu0 0.0
  %363 = vmatprep.subr.mxu0 0.0
  %364 = vmatpush1.msra.mxu0 0.0
  %365 = vmatprep.subr.mxu0 0.0
  %366 = vmatpush1.msra.mxu0 0.0
  %367 = vmatprep.subr.mxu0 0.0
  %368 = vmatpush1.msra.mxu0 0.0
  %369 = vmatprep.subr.mxu0 0.0
  %370 = vmatpush1.msra.mxu0 0.0
  %371 = vmatprep.subr.mxu0 0.0
  %372 = vmatpush1.msra.mxu0 0.0
  %373 = vmatprep.subr.mxu0 0.0
  %374 = vmatpush1.msra.mxu0 0.0
  %375 = vmatprep.subr.mxu0 0.0
  %376 = vmatpush1.msra.mxu0 0.0
  %377 = vmatprep.subr.mxu0 0.0
  %378 = vmatpush1.msra.mxu0 0.0
  %379 = vmatprep.subr.mxu0 0.0
  %380 = vmatpush1.msra.mxu0 0.0
  %381 = vmatprep.subr.mxu0 0.0
  %382 = vmatpush1.msra.mxu0 0.0
  %383 = vmatprep.subr.mxu0 0.0
  %384 = vmatpush1.msra.mxu0 0.0
  %385 = vmatprep.subr.mxu0 0.0
  %386 = vmatpush1.msra.mxu0 %v138
  %387 = vmatprep.subr.mxu0 0.0
  %388 = vmatpush1.msra.mxu0 %v133
  %389 = vmatprep.subr.mxu0 0.0
  %390 = vmatpush2.msra.mxu0 0.0
  %391 = vmatprep.subr.mxu0 0.0
  %392 = vmatpush2.msra.mxu0 0.0
  %393 = vmatprep.subr.mxu0 0.0
  %394 = vmatpush2.msra.mxu0 0.0
  %395 = vmatprep.subr.mxu0 0.0
  %396 = vmatpush2.msra.mxu0 0.0
  %397 = vmatprep.subr.mxu0 0.0
  %398 = vmatpush2.msra.mxu0 0.0
  %399 = vmatprep.subr.mxu0 0.0
  %400 = vmatpush2.msra.mxu0 0.0
  %401 = vmatprep.subr.mxu0 0.0
  %402 = vmatpush2.msra.mxu0 0.0
  %403 = vmatprep.subr.mxu0 0.0
  %404 = vmatpush2.msra.mxu0 0.0
  %405 = vmatprep.subr.mxu0 0.0
  %406 = vmatpush2.msra.mxu0 0.0
  %407 = vmatprep.subr.mxu0 0.0
  %408 = vmatpush2.msra.mxu0 0.0
  %409 = vmatprep.subr.mxu0 0.0
  %410 = vmatpush2.msra.mxu0 0.0
  %411 = vmatprep.subr.mxu0 0.0
  %412 = vmatpush2.msra.mxu0 0.0
  %413 = vmatprep.subr.mxu0 0.0
  %414 = vmatpush2.msra.mxu0 0.0
  %415 = vmatprep.subr.mxu0 0.0
  %416 = vmatpush2.msra.mxu0 0.0
  %417 = vmatprep.subr.mxu0 0.0
  %418 = vmatpush2.msra.mxu0 0.0
  %419 = vmatprep.subr.mxu0 0.0
  %420 = vmatpush2.msra.mxu0 0.0
  %421 = vmatprep.mubr.f32.mxu0 0.0
  %422 = vmatmul.mubr.f32.gmra.mxu0 %v352
  %v423 = vpop.f32.mrf.mxu0
  %v424 = vadd.f32 0.0, %v423
  %v425 = vpop.f32.mrf.mxu0
  %426 = vmatprep.mubr.f32.mxu0 0.0
  %427 = vmatmul.mubr.f32.gmra.mxu0 %v355
  %v428 = vpop.f32.mrf.mxu0
  %v429 = vadd.f32 0.0, %v428
  %v430 = vpop.f32.mrf.mxu0
  %431 = vdwg.mxu0
  %v432 = vmul.f32 %v424, %v349
  %v433 = vmul.f32 %v429, %v350
  %vm434 = vcmp.gt.f32.partialorder %v432, 0.0
  %vm435 = vcmp.gt.f32.partialorder %v433, 0.0
  %v436 = vmin.f32 %v432, 0.0
  %v437 = vmin.f32 %v433, 0.0
  %v438 = vmul.f32 %v436, 1.442695
  %v439 = vpow.pop %v438
  %v440 = vmul.f32 %v437, 1.442695
  %v441 = vpow.pop %v440
  %v442 = vsub.f32 %v439, 1.0
  %v443 = vsub.f32 %v441, 1.0
  %v444 = vsel %vm434, %v432, %v442
  %v445 = vsel %vm435, %v433, %v443
  %446 = vmatprep.subr.mxu0 0.0
  %447 = vmatpush1.xpose.msra.mxu0 0.0
  %448 = vmatprep.subr.mxu0 0.0
  %449 = vmatpush1.xpose.msra.mxu0 0.0
  %450 = vmatprep.subr.mxu0 0.0
  %451 = vmatpush1.xpose.msra.mxu0 0.0
  %452 = vmatprep.subr.mxu0 0.0
  %453 = vmatpush1.xpose.msra.mxu0 0.0
  %454 = vmatprep.subr.mxu0 0.0
  %455 = vmatpush1.xpose.msra.mxu0 0.0
  %456 = vmatprep.subr.mxu0 0.0
  %457 = vmatpush1.xpose.msra.mxu0 0.0
  %458 = vmatprep.subr.mxu0 0.0
  %459 = vmatpush1.xpose.msra.mxu0 0.0
  %460 = vmatprep.subr.mxu0 0.0
  %461 = vmatpush1.xpose.msra.mxu0 0.0
  %462 = vmatprep.subr.mxu0 0.0
  %463 = vmatpush1.xpose.msra.mxu0 0.0
  %464 = vmatprep.subr.mxu0 0.0
  %465 = vmatpush1.xpose.msra.mxu0 0.0
  %466 = vmatprep.subr.mxu0 0.0
  %467 = vmatpush1.xpose.msra.mxu0 0.0
  %468 = vmatprep.subr.mxu0 0.0
  %469 = vmatpush1.xpose.msra.mxu0 0.0
  %470 = vmatprep.subr.mxu0 0.0
  %471 = vmatpush1.xpose.msra.mxu0 0.0
  %472 = vmatprep.subr.mxu0 0.0
  %473 = vmatpush1.xpose.msra.mxu0 0.0
  %474 = vmatprep.subr.mxu0 0.0
  %475 = vmatpush1.xpose.msra.mxu0 %v148
  %476 = vmatprep.subr.mxu0 0.0
  %477 = vmatpush1.xpose.msra.mxu0 %v143
  %478 = vmatprep.subr.mxu0 0.0
  %479 = vmatpush2.xpose.msra.mxu0 0.0
  %480 = vmatprep.subr.mxu0 0.0
  %481 = vmatpush2.xpose.msra.mxu0 0.0
  %482 = vmatprep.subr.mxu0 0.0
  %483 = vmatpush2.xpose.msra.mxu0 0.0
  %484 = vmatprep.subr.mxu0 0.0
  %485 = vmatpush2.xpose.msra.mxu0 0.0
  %486 = vmatprep.subr.mxu0 0.0
  %487 = vmatpush2.xpose.msra.mxu0 0.0
  %488 = vmatprep.subr.mxu0 0.0
  %489 = vmatpush2.xpose.msra.mxu0 0.0
  %490 = vmatprep.subr.mxu0 0.0
  %491 = vmatpush2.xpose.msra.mxu0 0.0
  %492 = vmatprep.subr.mxu0 0.0
  %493 = vmatpush2.xpose.msra.mxu0 0.0
  %494 = vmatprep.subr.mxu0 0.0
  %495 = vmatpush2.xpose.msra.mxu0 0.0
  %496 = vmatprep.subr.mxu0 0.0
  %497 = vmatpush2.xpose.msra.mxu0 0.0
  %498 = vmatprep.subr.mxu0 0.0
  %499 = vmatpush2.xpose.msra.mxu0 0.0
  %500 = vmatprep.subr.mxu0 0.0
  %501 = vmatpush2.xpose.msra.mxu0 0.0
  %502 = vmatprep.subr.mxu0 0.0
  %503 = vmatpush2.xpose.msra.mxu0 0.0
  %504 = vmatprep.subr.mxu0 0.0
  %505 = vmatpush2.xpose.msra.mxu0 0.0
  %506 = vmatprep.subr.mxu0 0.0
  %507 = vmatpush2.xpose.msra.mxu0 0.0
  %508 = vmatprep.subr.mxu0 0.0
  %509 = vmatpush2.xpose.msra.mxu0 0.0
  %510 = vmatprep.mubr.f32.mxu0 0.0
  %511 = vmatmul.mubr.f32.gmra.mxu0 %v65
  %v512 = vpop.f32.mrf.mxu0
  %v513 = vadd.f32 0.0, %v512
  %v514 = vpop.f32.mrf.mxu0
  %515 = vdwg.mxu0
  %517 = vset.pattern.permute.xlu0 0
  %518 = vperm.xlu0 %517, %v228
  %v519 = vpop.permute.xlu0 %518
  %522 = vset.pattern.permute.xlu0 0
  %523 = vperm.xlu0 %522, %v233
  %v524 = vpop.permute.xlu0 %523
  %v526 = vlaneseq
  %v527 = vshrl.u32 %v526, 7
  %v528 = vsub.s32 0, %v527
  %v529 = vrot.slane %v513, %v528
  %v530 = vadd.f32 %v519, %v529
  %v531 = vadd.f32 %v524, %v529
  %v532 = vmul.f32 %v530, 0.2
  %v533 = vmul.f32 %v531, 0.2
  %v534 = vmax.f32 %v530, %v532
  %v535 = vmax.f32 %v531, %v533
  %v536 = vadd.f32 %v534, %v326
  %v537 = vadd.f32 %v535, %v327
  %v538 = vsel %vm330, %v536, -inf
  %539 = vmax.xlane.f32.xlu0 %v538
  %v540 = vpop.xlane.xlu0 %539
  %v541 = vsel %vm330, %v537, -inf
  %542 = vmax.xlane.f32.xlu0 %v541
  %v543 = vpop.xlane.xlu0 %542
  %v544 = vsub.f32 %v536, %v540
  %v545 = vsub.f32 %v537, %v543
  %v546 = vmul.f32 %v544, 1.442695
  %v547 = vpow.pop %v546
  %v548 = vmul.f32 %v545, 1.442695
  %v549 = vpow.pop %v548
  %v550 = vsel %vm330, %v547, 0.0
  %551 = vadd.xlane.f32.xlu0 %v550
  %v552 = vpop.xlane.xlu0 %551
  %v553 = vsel %vm330, %v549, 0.0
  %554 = vadd.xlane.f32.xlu0 %v553
  %v555 = vpop.xlane.xlu0 %554
  %v556 = vrcp.pop %v552
  %v557 = vrcp.pop %v555
  %v559 = vsel %vm330, %v547, 0
  %v562 = vsel %vm330, %v549, 0
  %564 = vmatprep.subr.mxu0 0.0
  %565 = vmatpush1.msra.mxu0 0.0
  %566 = vmatprep.subr.mxu0 0.0
  %567 = vmatpush1.msra.mxu0 0.0
  %568 = vmatprep.subr.mxu0 0.0
  %569 = vmatpush1.msra.mxu0 0.0
  %570 = vmatprep.subr.mxu0 0.0
  %571 = vmatpush1.msra.mxu0 0.0
  %572 = vmatprep.subr.mxu0 0.0
  %573 = vmatpush1.msra.mxu0 0.0
  %574 = vmatprep.subr.mxu0 0.0
  %575 = vmatpush1.msra.mxu0 0.0
  %576 = vmatprep.subr.mxu0 0.0
  %577 = vmatpush1.msra.mxu0 0.0
  %578 = vmatprep.subr.mxu0 0.0
  %579 = vmatpush1.msra.mxu0 0.0
  %580 = vmatprep.subr.mxu0 0.0
  %581 = vmatpush1.msra.mxu0 0.0
  %582 = vmatprep.subr.mxu0 0.0
  %583 = vmatpush1.msra.mxu0 0.0
  %584 = vmatprep.subr.mxu0 0.0
  %585 = vmatpush1.msra.mxu0 0.0
  %586 = vmatprep.subr.mxu0 0.0
  %587 = vmatpush1.msra.mxu0 0.0
  %588 = vmatprep.subr.mxu0 0.0
  %589 = vmatpush1.msra.mxu0 0.0
  %590 = vmatprep.subr.mxu0 0.0
  %591 = vmatpush1.msra.mxu0 0.0
  %592 = vmatprep.subr.mxu0 0.0
  %593 = vmatpush1.msra.mxu0 %v148
  %594 = vmatprep.subr.mxu0 0.0
  %595 = vmatpush1.msra.mxu0 %v143
  %596 = vmatprep.subr.mxu0 0.0
  %597 = vmatpush2.msra.mxu0 0.0
  %598 = vmatprep.subr.mxu0 0.0
  %599 = vmatpush2.msra.mxu0 0.0
  %600 = vmatprep.subr.mxu0 0.0
  %601 = vmatpush2.msra.mxu0 0.0
  %602 = vmatprep.subr.mxu0 0.0
  %603 = vmatpush2.msra.mxu0 0.0
  %604 = vmatprep.subr.mxu0 0.0
  %605 = vmatpush2.msra.mxu0 0.0
  %606 = vmatprep.subr.mxu0 0.0
  %607 = vmatpush2.msra.mxu0 0.0
  %608 = vmatprep.subr.mxu0 0.0
  %609 = vmatpush2.msra.mxu0 0.0
  %610 = vmatprep.subr.mxu0 0.0
  %611 = vmatpush2.msra.mxu0 0.0
  %612 = vmatprep.subr.mxu0 0.0
  %613 = vmatpush2.msra.mxu0 0.0
  %614 = vmatprep.subr.mxu0 0.0
  %615 = vmatpush2.msra.mxu0 0.0
  %616 = vmatprep.subr.mxu0 0.0
  %617 = vmatpush2.msra.mxu0 0.0
  %618 = vmatprep.subr.mxu0 0.0
  %619 = vmatpush2.msra.mxu0 0.0
  %620 = vmatprep.subr.mxu0 0.0
  %621 = vmatpush2.msra.mxu0 0.0
  %622 = vmatprep.subr.mxu0 0.0
  %623 = vmatpush2.msra.mxu0 0.0
  %624 = vmatprep.subr.mxu0 0.0
  %625 = vmatpush2.msra.mxu0 0.0
  %626 = vmatprep.subr.mxu0 0.0
  %627 = vmatpush2.msra.mxu0 0.0
  %628 = vmatprep.mubr.f32.mxu0 0.0
  %629 = vmatmul.mubr.f32.gmra.mxu0 %v559
  %v630 = vpop.f32.mrf.mxu0
  %v631 = vadd.f32 0.0, %v630
  %v632 = vpop.f32.mrf.mxu0
  %633 = vmatprep.mubr.f32.mxu0 0.0
  %634 = vmatmul.mubr.f32.gmra.mxu0 %v562
  %v635 = vpop.f32.mrf.mxu0
  %v636 = vadd.f32 0.0, %v635
  %v637 = vpop.f32.mrf.mxu0
  %638 = vdwg.mxu0
  %v639 = vmul.f32 %v631, %v556
  %v640 = vmul.f32 %v636, %v557
  %vm641 = vcmp.gt.f32.partialorder %v639, 0.0
  %vm642 = vcmp.gt.f32.partialorder %v640, 0.0
  %v643 = vmin.f32 %v639, 0.0
  %v644 = vmin.f32 %v640, 0.0
  %v645 = vmul.f32 %v643, 1.442695
  %v646 = vpow.pop %v645
  %v647 = vmul.f32 %v644, 1.442695
  %v648 = vpow.pop %v647
  %v649 = vsub.f32 %v646, 1.0
  %v650 = vsub.f32 %v648, 1.0
  %v651 = vsel %vm641, %v639, %v649
  %v652 = vsel %vm642, %v640, %v650
  %v653 = vld [vmem:[%s5] sm:$0xff]
  %v654 = vld [vmem:[%s5 + $0x8] sm:$0xff]
  %v655 = vld [vmem:[%s5 + $0x10] sm:$0xff]
  %v656 = vld [vmem:[%s5 + $0x18] sm:$0xff]
  %v657 = vld [vmem:[%s5 + $0x20] sm:$0xff]
  %v658 = vld [vmem:[%s5 + $0x28] sm:$0xff]
  %v659 = vld [vmem:[%s5 + $0x30] sm:$0xff]
  %v660 = vld [vmem:[%s5 + $0x38] sm:$0xff]
  %v661 = vld [vmem:[%s5 + $0x40] sm:$0xff]
  %v662 = vld [vmem:[%s5 + $0x48] sm:$0xff]
  %v663 = vld [vmem:[%s5 + $0x50] sm:$0xff]
  %v664 = vld [vmem:[%s5 + $0x58] sm:$0xff]
  %v665 = vld [vmem:[%s5 + $0x60] sm:$0xff]
  %v666 = vld [vmem:[%s5 + $0x68] sm:$0xff]
  %v667 = vld [vmem:[%s5 + $0x70] sm:$0xff]
  %v668 = vld [vmem:[%s5 + $0x78] sm:$0xff]
  %v669 = vld [vmem:[%s6] sm:$0xff]
  %v670 = vld [vmem:[%s6 + $0x8] sm:$0xff]
  %v671 = vld [vmem:[%s6 + $0x10] sm:$0xff]
  %v672 = vld [vmem:[%s6 + $0x18] sm:$0xff]
  %v673 = vld [vmem:[%s6 + $0x20] sm:$0xff]
  %v674 = vld [vmem:[%s6 + $0x28] sm:$0xff]
  %v675 = vld [vmem:[%s6 + $0x30] sm:$0xff]
  %v676 = vld [vmem:[%s6 + $0x38] sm:$0xff]
  %v677 = vld [vmem:[%s6 + $0x40] sm:$0xff]
  %v678 = vld [vmem:[%s6 + $0x48] sm:$0xff]
  %v679 = vld [vmem:[%s6 + $0x50] sm:$0xff]
  %v680 = vld [vmem:[%s6 + $0x58] sm:$0xff]
  %v681 = vld [vmem:[%s6 + $0x60] sm:$0xff]
  %v682 = vld [vmem:[%s6 + $0x68] sm:$0xff]
  %v683 = vld [vmem:[%s6 + $0x70] sm:$0xff]
  %v684 = vld [vmem:[%s6 + $0x78] sm:$0xff]
  %v685 = vld [vmem:[%s7] sm:$0x1]
  %686 = vmatprep.subr.mxu0 0.0
  %687 = vmatpush1.msra.mxu0 %v668
  %688 = vmatprep.subr.mxu0 0.0
  %689 = vmatpush1.msra.mxu0 %v667
  %690 = vmatprep.subr.mxu0 0.0
  %691 = vmatpush1.msra.mxu0 %v666
  %692 = vmatprep.subr.mxu0 0.0
  %693 = vmatpush1.msra.mxu0 %v665
  %694 = vmatprep.subr.mxu0 0.0
  %695 = vmatpush1.msra.mxu0 %v664
  %696 = vmatprep.subr.mxu0 0.0
  %697 = vmatpush1.msra.mxu0 %v663
  %698 = vmatprep.subr.mxu0 0.0
  %699 = vmatpush1.msra.mxu0 %v662
  %700 = vmatprep.subr.mxu0 0.0
  %701 = vmatpush1.msra.mxu0 %v661
  %702 = vmatprep.subr.mxu0 0.0
  %703 = vmatpush1.msra.mxu0 %v660
  %704 = vmatprep.subr.mxu0 0.0
  %705 = vmatpush1.msra.mxu0 %v659
  %706 = vmatprep.subr.mxu0 0.0
  %707 = vmatpush1.msra.mxu0 %v658
  %708 = vmatprep.subr.mxu0 0.0
  %709 = vmatpush1.msra.mxu0 %v657
  %710 = vmatprep.subr.mxu0 0.0
  %711 = vmatpush1.msra.mxu0 %v656
  %712 = vmatprep.subr.mxu0 0.0
  %713 = vmatpush1.msra.mxu0 %v655
  %714 = vmatprep.subr.mxu0 0.0
  %715 = vmatpush1.msra.mxu0 %v654
  %716 = vmatprep.subr.mxu0 0.0
  %717 = vmatpush1.msra.mxu0 %v653
  %718 = vmatprep.subr.mxu0 0.0
  %719 = vmatpush2.msra.mxu0 0.0
  %720 = vmatprep.subr.mxu0 0.0
  %721 = vmatpush2.msra.mxu0 0.0
  %722 = vmatprep.subr.mxu0 0.0
  %723 = vmatpush2.msra.mxu0 0.0
  %724 = vmatprep.subr.mxu0 0.0
  %725 = vmatpush2.msra.mxu0 0.0
  %726 = vmatprep.subr.mxu0 0.0
  %727 = vmatpush2.msra.mxu0 0.0
  %728 = vmatprep.subr.mxu0 0.0
  %729 = vmatpush2.msra.mxu0 0.0
  %730 = vmatprep.subr.mxu0 0.0
  %731 = vmatpush2.msra.mxu0 0.0
  %732 = vmatprep.subr.mxu0 0.0
  %733 = vmatpush2.msra.mxu0 0.0
  %734 = vmatprep.subr.mxu0 0.0
  %735 = vmatpush2.msra.mxu0 0.0
  %736 = vmatprep.subr.mxu0 0.0
  %737 = vmatpush2.msra.mxu0 0.0
  %738 = vmatprep.subr.mxu0 0.0
  %739 = vmatpush2.msra.mxu0 0.0
  %740 = vmatprep.subr.mxu0 0.0
  %741 = vmatpush2.msra.mxu0 0.0
  %742 = vmatprep.subr.mxu0 0.0
  %743 = vmatpush2.msra.mxu0 0.0
  %744 = vmatprep.subr.mxu0 0.0
  %745 = vmatpush2.msra.mxu0 0.0
  %746 = vmatprep.subr.mxu0 0.0
  %747 = vmatpush2.msra.mxu0 0.0
  %748 = vmatprep.subr.mxu0 0.0
  %749 = vmatpush2.msra.mxu0 0.0
  %750 = vmatprep.mubr.f32.mxu0 0.0
  %751 = vmatmul.mubr.f32.gmra.mxu0 %v444
  %v752 = vpop.f32.mrf.mxu0
  %v753 = vadd.f32 0.0, %v752
  %v754 = vpop.f32.mrf.mxu0
  %755 = vmatprep.mubr.f32.mxu0 0.0
  %756 = vmatmul.mubr.f32.gmra.mxu0 %v445
  %v757 = vpop.f32.mrf.mxu0
  %v758 = vadd.f32 0.0, %v757
  %v759 = vpop.f32.mrf.mxu0
  %760 = vmatprep.mubr.f32.mxu0 0.0
  %761 = vmatmul.mubr.f32.gmra.mxu0 %v651
  %v762 = vpop.f32.mrf.mxu0
  %v763 = vadd.f32 0.0, %v762
  %v764 = vpop.f32.mrf.mxu0
  %765 = vmatprep.mubr.f32.mxu0 0.0
  %766 = vmatmul.mubr.f32.gmra.mxu0 %v652
  %v767 = vpop.f32.mrf.mxu0
  %v768 = vadd.f32 0.0, %v767
  %v769 = vpop.f32.mrf.mxu0
  %770 = vdwg.mxu0
  %771 = vmatprep.subr.mxu0 0.0
  %772 = vmatpush1.msra.mxu0 %v684
  %773 = vmatprep.subr.mxu0 0.0
  %774 = vmatpush1.msra.mxu0 %v683
  %775 = vmatprep.subr.mxu0 0.0
  %776 = vmatpush1.msra.mxu0 %v682
  %777 = vmatprep.subr.mxu0 0.0
  %778 = vmatpush1.msra.mxu0 %v681
  %779 = vmatprep.subr.mxu0 0.0
  %780 = vmatpush1.msra.mxu0 %v680
  %781 = vmatprep.subr.mxu0 0.0
  %782 = vmatpush1.msra.mxu0 %v679
  %783 = vmatprep.subr.mxu0 0.0
  %784 = vmatpush1.msra.mxu0 %v678
  %785 = vmatprep.subr.mxu0 0.0
  %786 = vmatpush1.msra.mxu0 %v677
  %787 = vmatprep.subr.mxu0 0.0
  %788 = vmatpush1.msra.mxu0 %v676
  %789 = vmatprep.subr.mxu0 0.0
  %790 = vmatpush1.msra.mxu0 %v675
  %791 = vmatprep.subr.mxu0 0.0
  %792 = vmatpush1.msra.mxu0 %v674
  %793 = vmatprep.subr.mxu0 0.0
  %794 = vmatpush1.msra.mxu0 %v673
  %795 = vmatprep.subr.mxu0 0.0
  %796 = vmatpush1.msra.mxu0 %v672
  %797 = vmatprep.subr.mxu0 0.0
  %798 = vmatpush1.msra.mxu0 %v671
  %799 = vmatprep.subr.mxu0 0.0
  %800 = vmatpush1.msra.mxu0 %v670
  %801 = vmatprep.subr.mxu0 0.0
  %802 = vmatpush1.msra.mxu0 %v669
  %803 = vmatprep.subr.mxu0 0.0
  %804 = vmatpush2.msra.mxu0 0.0
  %805 = vmatprep.subr.mxu0 0.0
  %806 = vmatpush2.msra.mxu0 0.0
  %807 = vmatprep.subr.mxu0 0.0
  %808 = vmatpush2.msra.mxu0 0.0
  %809 = vmatprep.subr.mxu0 0.0
  %810 = vmatpush2.msra.mxu0 0.0
  %811 = vmatprep.subr.mxu0 0.0
  %812 = vmatpush2.msra.mxu0 0.0
  %813 = vmatprep.subr.mxu0 0.0
  %814 = vmatpush2.msra.mxu0 0.0
  %815 = vmatprep.subr.mxu0 0.0
  %816 = vmatpush2.msra.mxu0 0.0
  %817 = vmatprep.subr.mxu0 0.0
  %818 = vmatpush2.msra.mxu0 0.0
  %819 = vmatprep.subr.mxu0 0.0
  %820 = vmatpush2.msra.mxu0 0.0
  %821 = vmatprep.subr.mxu0 0.0
  %822 = vmatpush2.msra.mxu0 0.0
  %823 = vmatprep.subr.mxu0 0.0
  %824 = vmatpush2.msra.mxu0 0.0
  %825 = vmatprep.subr.mxu0 0.0
  %826 = vmatpush2.msra.mxu0 0.0
  %827 = vmatprep.subr.mxu0 0.0
  %828 = vmatpush2.msra.mxu0 0.0
  %829 = vmatprep.subr.mxu0 0.0
  %830 = vmatpush2.msra.mxu0 0.0
  %831 = vmatprep.subr.mxu0 0.0
  %832 = vmatpush2.msra.mxu0 0.0
  %833 = vmatprep.subr.mxu0 0.0
  %834 = vmatpush2.msra.mxu0 0.0
  %835 = vmatprep.mubr.f32.mxu0 0.0
  %836 = vmatmul.mubr.f32.gmra.mxu0 %v753
  %v837 = vpop.f32.mrf.mxu0
  %v838 = vadd.f32 0.0, %v837
  %v839 = vpop.f32.mrf.mxu0
  %840 = vmatprep.mubr.f32.mxu0 0.0
  %841 = vmatmul.mubr.f32.gmra.mxu0 %v758
  %v842 = vpop.f32.mrf.mxu0
  %v843 = vadd.f32 0.0, %v842
  %v844 = vpop.f32.mrf.mxu0
  %845 = vmatprep.mubr.f32.mxu0 0.0
  %846 = vmatmul.mubr.f32.gmra.mxu0 %v763
  %v847 = vpop.f32.mrf.mxu0
  %v848 = vadd.f32 0.0, %v847
  %v849 = vpop.f32.mrf.mxu0
  %850 = vmatprep.mubr.f32.mxu0 0.0
  %851 = vmatmul.mubr.f32.gmra.mxu0 %v768
  %v852 = vpop.f32.mrf.mxu0
  %v853 = vadd.f32 0.0, %v852
  %v854 = vpop.f32.mrf.mxu0
  %855 = vdwg.mxu0
  %856 = vmatprep.subr.mxu0 0.0
  %857 = vmatpush1.xpose.msra.mxu0 0.0
  %858 = vmatprep.subr.mxu0 0.0
  %859 = vmatpush1.xpose.msra.mxu0 0.0
  %860 = vmatprep.subr.mxu0 0.0
  %861 = vmatpush1.xpose.msra.mxu0 0.0
  %862 = vmatprep.subr.mxu0 0.0
  %863 = vmatpush1.xpose.msra.mxu0 0.0
  %864 = vmatprep.subr.mxu0 0.0
  %865 = vmatpush1.xpose.msra.mxu0 0.0
  %866 = vmatprep.subr.mxu0 0.0
  %867 = vmatpush1.xpose.msra.mxu0 0.0
  %868 = vmatprep.subr.mxu0 0.0
  %869 = vmatpush1.xpose.msra.mxu0 0.0
  %870 = vmatprep.subr.mxu0 0.0
  %871 = vmatpush1.xpose.msra.mxu0 0.0
  %872 = vmatprep.subr.mxu0 0.0
  %873 = vmatpush1.xpose.msra.mxu0 0.0
  %874 = vmatprep.subr.mxu0 0.0
  %875 = vmatpush1.xpose.msra.mxu0 0.0
  %876 = vmatprep.subr.mxu0 0.0
  %877 = vmatpush1.xpose.msra.mxu0 0.0
  %878 = vmatprep.subr.mxu0 0.0
  %879 = vmatpush1.xpose.msra.mxu0 0.0
  %880 = vmatprep.subr.mxu0 0.0
  %881 = vmatpush1.xpose.msra.mxu0 0.0
  %882 = vmatprep.subr.mxu0 0.0
  %883 = vmatpush1.xpose.msra.mxu0 0.0
  %884 = vmatprep.subr.mxu0 0.0
  %885 = vmatpush1.xpose.msra.mxu0 %v758
  %886 = vmatprep.subr.mxu0 0.0
  %887 = vmatpush1.xpose.msra.mxu0 %v753
  %888 = vmatprep.subr.mxu0 0.0
  %889 = vmatpush2.xpose.msra.mxu0 0.0
  %890 = vmatprep.subr.mxu0 0.0
  %891 = vmatpush2.xpose.msra.mxu0 0.0
  %892 = vmatprep.subr.mxu0 0.0
  %893 = vmatpush2.xpose.msra.mxu0 0.0
  %894 = vmatprep.subr.mxu0 0.0
  %895 = vmatpush2.xpose.msra.mxu0 0.0
  %896 = vmatprep.subr.mxu0 0.0
  %897 = vmatpush2.xpose.msra.mxu0 0.0
  %898 = vmatprep.subr.mxu0 0.0
  %899 = vmatpush2.xpose.msra.mxu0 0.0
  %900 = vmatprep.subr.mxu0 0.0
  %901 = vmatpush2.xpose.msra.mxu0 0.0
  %902 = vmatprep.subr.mxu0 0.0
  %903 = vmatpush2.xpose.msra.mxu0 0.0
  %904 = vmatprep.subr.mxu0 0.0
  %905 = vmatpush2.xpose.msra.mxu0 0.0
  %906 = vmatprep.subr.mxu0 0.0
  %907 = vmatpush2.xpose.msra.mxu0 0.0
  %908 = vmatprep.subr.mxu0 0.0
  %909 = vmatpush2.xpose.msra.mxu0 0.0
  %910 = vmatprep.subr.mxu0 0.0
  %911 = vmatpush2.xpose.msra.mxu0 0.0
  %912 = vmatprep.subr.mxu0 0.0
  %913 = vmatpush2.xpose.msra.mxu0 0.0
  %914 = vmatprep.subr.mxu0 0.0
  %915 = vmatpush2.xpose.msra.mxu0 0.0
  %916 = vmatprep.subr.mxu0 0.0
  %917 = vmatpush2.xpose.msra.mxu0 0.0
  %918 = vmatprep.subr.mxu0 0.0
  %919 = vmatpush2.xpose.msra.mxu0 0.0
  %920 = vmatprep.mubr.f32.mxu0 0.0
  %921 = vmatmul.mubr.f32.gmra.mxu0 %v685
  %v922 = vpop.f32.mrf.mxu0
  %v923 = vadd.f32 0.0, %v922
  %v924 = vpop.f32.mrf.mxu0
  %925 = vdwg.mxu0
  %927 = vset.pattern.permute.xlu0 0
  %928 = vperm.xlu0 %927, %v838
  %v929 = vpop.permute.xlu0 %928
  %932 = vset.pattern.permute.xlu0 0
  %933 = vperm.xlu0 %932, %v843
  %v934 = vpop.permute.xlu0 %933
  %v936 = vlaneseq
  %v937 = vshrl.u32 %v936, 7
  %v938 = vsub.s32 0, %v937
  %v939 = vrot.slane %v923, %v938
  %v940 = vadd.f32 %v929, %v939
  %v941 = vadd.f32 %v934, %v939
  %v942 = vmul.f32 %v940, 0.2
  %v943 = vmul.f32 %v941, 0.2
  %v944 = vmax.f32 %v940, %v942
  %v945 = vmax.f32 %v941, %v943
  %v946 = vsel %vm330, %v944, -inf
  %947 = vmax.xlane.f32.xlu0 %v946
  %v948 = vpop.xlane.xlu0 %947
  %v949 = vsel %vm330, %v945, -inf
  %950 = vmax.xlane.f32.xlu0 %v949
  %v951 = vpop.xlane.xlu0 %950
  %v952 = vsub.f32 %v944, %v948
  %v953 = vsub.f32 %v945, %v951
  %v954 = vmul.f32 %v952, 1.442695
  %v955 = vpow.pop %v954
  %v956 = vmul.f32 %v953, 1.442695
  %v957 = vpow.pop %v956
  %v958 = vsel %vm330, %v955, 0.0
  %959 = vadd.xlane.f32.xlu0 %v958
  %v960 = vpop.xlane.xlu0 %959
  %v961 = vsel %vm330, %v957, 0.0
  %962 = vadd.xlane.f32.xlu0 %v961
  %v963 = vpop.xlane.xlu0 %962
  %v964 = vrcp.pop %v960
  %v965 = vrcp.pop %v963
  %v967 = vsel %vm330, %v955, 0
  %v970 = vsel %vm330, %v957, 0
  %972 = vmatprep.subr.mxu0 0.0
  %973 = vmatpush1.msra.mxu0 0.0
  %974 = vmatprep.subr.mxu0 0.0
  %975 = vmatpush1.msra.mxu0 0.0
  %976 = vmatprep.subr.mxu0 0.0
  %977 = vmatpush1.msra.mxu0 0.0
  %978 = vmatprep.subr.mxu0 0.0
  %979 = vmatpush1.msra.mxu0 0.0
  %980 = vmatprep.subr.mxu0 0.0
  %981 = vmatpush1.msra.mxu0 0.0
  %982 = vmatprep.subr.mxu0 0.0
  %983 = vmatpush1.msra.mxu0 0.0
  %984 = vmatprep.subr.mxu0 0.0
  %985 = vmatpush1.msra.mxu0 0.0
  %986 = vmatprep.subr.mxu0 0.0
  %987 = vmatpush1.msra.mxu0 0.0
  %988 = vmatprep.subr.mxu0 0.0
  %989 = vmatpush1.msra.mxu0 0.0
  %990 = vmatprep.subr.mxu0 0.0
  %991 = vmatpush1.msra.mxu0 0.0
  %992 = vmatprep.subr.mxu0 0.0
  %993 = vmatpush1.msra.mxu0 0.0
  %994 = vmatprep.subr.mxu0 0.0
  %995 = vmatpush1.msra.mxu0 0.0
  %996 = vmatprep.subr.mxu0 0.0
  %997 = vmatpush1.msra.mxu0 0.0
  %998 = vmatprep.subr.mxu0 0.0
  %999 = vmatpush1.msra.mxu0 0.0
  %1000 = vmatprep.subr.mxu0 0.0
  %1001 = vmatpush1.msra.mxu0 %v758
  %1002 = vmatprep.subr.mxu0 0.0
  %1003 = vmatpush1.msra.mxu0 %v753
  %1004 = vmatprep.subr.mxu0 0.0
  %1005 = vmatpush2.msra.mxu0 0.0
  %1006 = vmatprep.subr.mxu0 0.0
  %1007 = vmatpush2.msra.mxu0 0.0
  %1008 = vmatprep.subr.mxu0 0.0
  %1009 = vmatpush2.msra.mxu0 0.0
  %1010 = vmatprep.subr.mxu0 0.0
  %1011 = vmatpush2.msra.mxu0 0.0
  %1012 = vmatprep.subr.mxu0 0.0
  %1013 = vmatpush2.msra.mxu0 0.0
  %1014 = vmatprep.subr.mxu0 0.0
  %1015 = vmatpush2.msra.mxu0 0.0
  %1016 = vmatprep.subr.mxu0 0.0
  %1017 = vmatpush2.msra.mxu0 0.0
  %1018 = vmatprep.subr.mxu0 0.0
  %1019 = vmatpush2.msra.mxu0 0.0
  %1020 = vmatprep.subr.mxu0 0.0
  %1021 = vmatpush2.msra.mxu0 0.0
  %1022 = vmatprep.subr.mxu0 0.0
  %1023 = vmatpush2.msra.mxu0 0.0
  %1024 = vmatprep.subr.mxu0 0.0
  %1025 = vmatpush2.msra.mxu0 0.0
  %1026 = vmatprep.subr.mxu0 0.0
  %1027 = vmatpush2.msra.mxu0 0.0
  %1028 = vmatprep.subr.mxu0 0.0
  %1029 = vmatpush2.msra.mxu0 0.0
  %1030 = vmatprep.subr.mxu0 0.0
  %1031 = vmatpush2.msra.mxu0 0.0
  %1032 = vmatprep.subr.mxu0 0.0
  %1033 = vmatpush2.msra.mxu0 0.0
  %1034 = vmatprep.subr.mxu0 0.0
  %1035 = vmatpush2.msra.mxu0 0.0
  %1036 = vmatprep.mubr.f32.mxu0 0.0
  %1037 = vmatmul.mubr.f32.gmra.mxu0 %v967
  %v1038 = vpop.f32.mrf.mxu0
  %v1039 = vadd.f32 0.0, %v1038
  %v1040 = vpop.f32.mrf.mxu0
  %1041 = vmatprep.mubr.f32.mxu0 0.0
  %1042 = vmatmul.mubr.f32.gmra.mxu0 %v970
  %v1043 = vpop.f32.mrf.mxu0
  %v1044 = vadd.f32 0.0, %v1043
  %v1045 = vpop.f32.mrf.mxu0
  %1046 = vdwg.mxu0
  %v1047 = vmul.f32 %v1039, %v964
  %v1048 = vmul.f32 %v1044, %v965
  %vm1049 = vcmp.gt.f32.partialorder %v1047, 0.0
  %vm1050 = vcmp.gt.f32.partialorder %v1048, 0.0
  %v1051 = vmin.f32 %v1047, 0.0
  %v1052 = vmin.f32 %v1048, 0.0
  %v1053 = vmul.f32 %v1051, 1.442695
  %v1054 = vpow.pop %v1053
  %v1055 = vmul.f32 %v1052, 1.442695
  %v1056 = vpow.pop %v1055
  %v1057 = vsub.f32 %v1054, 1.0
  %v1058 = vsub.f32 %v1056, 1.0
  %v1059 = vsel %vm1049, %v1047, %v1057
  %v1060 = vsel %vm1050, %v1048, %v1058
  %1061 = vmatprep.subr.mxu0 0.0
  %1062 = vmatpush1.xpose.msra.mxu0 0.0
  %1063 = vmatprep.subr.mxu0 0.0
  %1064 = vmatpush1.xpose.msra.mxu0 0.0
  %1065 = vmatprep.subr.mxu0 0.0
  %1066 = vmatpush1.xpose.msra.mxu0 0.0
  %1067 = vmatprep.subr.mxu0 0.0
  %1068 = vmatpush1.xpose.msra.mxu0 0.0
  %1069 = vmatprep.subr.mxu0 0.0
  %1070 = vmatpush1.xpose.msra.mxu0 0.0
  %1071 = vmatprep.subr.mxu0 0.0
  %1072 = vmatpush1.xpose.msra.mxu0 0.0
  %1073 = vmatprep.subr.mxu0 0.0
  %1074 = vmatpush1.xpose.msra.mxu0 0.0
  %1075 = vmatprep.subr.mxu0 0.0
  %1076 = vmatpush1.xpose.msra.mxu0 0.0
  %1077 = vmatprep.subr.mxu0 0.0
  %1078 = vmatpush1.xpose.msra.mxu0 0.0
  %1079 = vmatprep.subr.mxu0 0.0
  %1080 = vmatpush1.xpose.msra.mxu0 0.0
  %1081 = vmatprep.subr.mxu0 0.0
  %1082 = vmatpush1.xpose.msra.mxu0 0.0
  %1083 = vmatprep.subr.mxu0 0.0
  %1084 = vmatpush1.xpose.msra.mxu0 0.0
  %1085 = vmatprep.subr.mxu0 0.0
  %1086 = vmatpush1.xpose.msra.mxu0 0.0
  %1087 = vmatprep.subr.mxu0 0.0
  %1088 = vmatpush1.xpose.msra.mxu0 0.0
  %1089 = vmatprep.subr.mxu0 0.0
  %1090 = vmatpush1.xpose.msra.mxu0 %v768
  %1091 = vmatprep.subr.mxu0 0.0
  %1092 = vmatpush1.xpose.msra.mxu0 %v763
  %1093 = vmatprep.subr.mxu0 0.0
  %1094 = vmatpush2.xpose.msra.mxu0 0.0
  %1095 = vmatprep.subr.mxu0 0.0
  %1096 = vmatpush2.xpose.msra.mxu0 0.0
  %1097 = vmatprep.subr.mxu0 0.0
  %1098 = vmatpush2.xpose.msra.mxu0 0.0
  %1099 = vmatprep.subr.mxu0 0.0
  %1100 = vmatpush2.xpose.msra.mxu0 0.0
  %1101 = vmatprep.subr.mxu0 0.0
  %1102 = vmatpush2.xpose.msra.mxu0 0.0
  %1103 = vmatprep.subr.mxu0 0.0
  %1104 = vmatpush2.xpose.msra.mxu0 0.0
  %1105 = vmatprep.subr.mxu0 0.0
  %1106 = vmatpush2.xpose.msra.mxu0 0.0
  %1107 = vmatprep.subr.mxu0 0.0
  %1108 = vmatpush2.xpose.msra.mxu0 0.0
  %1109 = vmatprep.subr.mxu0 0.0
  %1110 = vmatpush2.xpose.msra.mxu0 0.0
  %1111 = vmatprep.subr.mxu0 0.0
  %1112 = vmatpush2.xpose.msra.mxu0 0.0
  %1113 = vmatprep.subr.mxu0 0.0
  %1114 = vmatpush2.xpose.msra.mxu0 0.0
  %1115 = vmatprep.subr.mxu0 0.0
  %1116 = vmatpush2.xpose.msra.mxu0 0.0
  %1117 = vmatprep.subr.mxu0 0.0
  %1118 = vmatpush2.xpose.msra.mxu0 0.0
  %1119 = vmatprep.subr.mxu0 0.0
  %1120 = vmatpush2.xpose.msra.mxu0 0.0
  %1121 = vmatprep.subr.mxu0 0.0
  %1122 = vmatpush2.xpose.msra.mxu0 0.0
  %1123 = vmatprep.subr.mxu0 0.0
  %1124 = vmatpush2.xpose.msra.mxu0 0.0
  %1125 = vmatprep.mubr.f32.mxu0 0.0
  %1126 = vmatmul.mubr.f32.gmra.mxu0 %v685
  %v1127 = vpop.f32.mrf.mxu0
  %v1128 = vadd.f32 0.0, %v1127
  %v1129 = vpop.f32.mrf.mxu0
  %1130 = vdwg.mxu0
  %1132 = vset.pattern.permute.xlu0 0
  %1133 = vperm.xlu0 %1132, %v848
  %v1134 = vpop.permute.xlu0 %1133
  %1137 = vset.pattern.permute.xlu0 0
  %1138 = vperm.xlu0 %1137, %v853
  %v1139 = vpop.permute.xlu0 %1138
  %v1141 = vlaneseq
  %v1142 = vshrl.u32 %v1141, 7
  %v1143 = vsub.s32 0, %v1142
  %v1144 = vrot.slane %v1128, %v1143
  %v1145 = vadd.f32 %v1134, %v1144
  %v1146 = vadd.f32 %v1139, %v1144
  %v1147 = vmul.f32 %v1145, 0.2
  %v1148 = vmul.f32 %v1146, 0.2
  %v1149 = vmax.f32 %v1145, %v1147
  %v1150 = vmax.f32 %v1146, %v1148
  %v1151 = vsel %vm330, %v1149, -inf
  %1152 = vmax.xlane.f32.xlu0 %v1151
  %v1153 = vpop.xlane.xlu0 %1152
  %v1154 = vsel %vm330, %v1150, -inf
  %1155 = vmax.xlane.f32.xlu0 %v1154
  %v1156 = vpop.xlane.xlu0 %1155
  %v1157 = vsub.f32 %v1149, %v1153
  %v1158 = vsub.f32 %v1150, %v1156
  %v1159 = vmul.f32 %v1157, 1.442695
  %v1160 = vpow.pop %v1159
  %v1161 = vmul.f32 %v1158, 1.442695
  %v1162 = vpow.pop %v1161
  %v1163 = vsel %vm330, %v1160, 0.0
  %1164 = vadd.xlane.f32.xlu0 %v1163
  %v1165 = vpop.xlane.xlu0 %1164
  %v1166 = vsel %vm330, %v1162, 0.0
  %1167 = vadd.xlane.f32.xlu0 %v1166
  %v1168 = vpop.xlane.xlu0 %1167
  %v1169 = vrcp.pop %v1165
  %v1170 = vrcp.pop %v1168
  %v1172 = vsel %vm330, %v1160, 0
  %v1175 = vsel %vm330, %v1162, 0
  %1177 = vmatprep.subr.mxu0 0.0
  %1178 = vmatpush1.msra.mxu0 0.0
  %1179 = vmatprep.subr.mxu0 0.0
  %1180 = vmatpush1.msra.mxu0 0.0
  %1181 = vmatprep.subr.mxu0 0.0
  %1182 = vmatpush1.msra.mxu0 0.0
  %1183 = vmatprep.subr.mxu0 0.0
  %1184 = vmatpush1.msra.mxu0 0.0
  %1185 = vmatprep.subr.mxu0 0.0
  %1186 = vmatpush1.msra.mxu0 0.0
  %1187 = vmatprep.subr.mxu0 0.0
  %1188 = vmatpush1.msra.mxu0 0.0
  %1189 = vmatprep.subr.mxu0 0.0
  %1190 = vmatpush1.msra.mxu0 0.0
  %1191 = vmatprep.subr.mxu0 0.0
  %1192 = vmatpush1.msra.mxu0 0.0
  %1193 = vmatprep.subr.mxu0 0.0
  %1194 = vmatpush1.msra.mxu0 0.0
  %1195 = vmatprep.subr.mxu0 0.0
  %1196 = vmatpush1.msra.mxu0 0.0
  %1197 = vmatprep.subr.mxu0 0.0
  %1198 = vmatpush1.msra.mxu0 0.0
  %1199 = vmatprep.subr.mxu0 0.0
  %1200 = vmatpush1.msra.mxu0 0.0
  %1201 = vmatprep.subr.mxu0 0.0
  %1202 = vmatpush1.msra.mxu0 0.0
  %1203 = vmatprep.subr.mxu0 0.0
  %1204 = vmatpush1.msra.mxu0 0.0
  %1205 = vmatprep.subr.mxu0 0.0
  %1206 = vmatpush1.msra.mxu0 %v768
  %1207 = vmatprep.subr.mxu0 0.0
  %1208 = vmatpush1.msra.mxu0 %v763
  %1209 = vmatprep.subr.mxu0 0.0
  %1210 = vmatpush2.msra.mxu0 0.0
  %1211 = vmatprep.subr.mxu0 0.0
  %1212 = vmatpush2.msra.mxu0 0.0
  %1213 = vmatprep.subr.mxu0 0.0
  %1214 = vmatpush2.msra.mxu0 0.0
  %1215 = vmatprep.subr.mxu0 0.0
  %1216 = vmatpush2.msra.mxu0 0.0
  %1217 = vmatprep.subr.mxu0 0.0
  %1218 = vmatpush2.msra.mxu0 0.0
  %1219 = vmatprep.subr.mxu0 0.0
  %1220 = vmatpush2.msra.mxu0 0.0
  %1221 = vmatprep.subr.mxu0 0.0
  %1222 = vmatpush2.msra.mxu0 0.0
  %1223 = vmatprep.subr.mxu0 0.0
  %1224 = vmatpush2.msra.mxu0 0.0
  %1225 = vmatprep.subr.mxu0 0.0
  %1226 = vmatpush2.msra.mxu0 0.0
  %1227 = vmatprep.subr.mxu0 0.0
  %1228 = vmatpush2.msra.mxu0 0.0
  %1229 = vmatprep.subr.mxu0 0.0
  %1230 = vmatpush2.msra.mxu0 0.0
  %1231 = vmatprep.subr.mxu0 0.0
  %1232 = vmatpush2.msra.mxu0 0.0
  %1233 = vmatprep.subr.mxu0 0.0
  %1234 = vmatpush2.msra.mxu0 0.0
  %1235 = vmatprep.subr.mxu0 0.0
  %1236 = vmatpush2.msra.mxu0 0.0
  %1237 = vmatprep.subr.mxu0 0.0
  %1238 = vmatpush2.msra.mxu0 0.0
  %1239 = vmatprep.subr.mxu0 0.0
  %1240 = vmatpush2.msra.mxu0 0.0
  %1241 = vmatprep.mubr.f32.mxu0 0.0
  %1242 = vmatmul.mubr.f32.gmra.mxu0 %v1172
  %v1243 = vpop.f32.mrf.mxu0
  %v1244 = vadd.f32 0.0, %v1243
  %v1245 = vpop.f32.mrf.mxu0
  %1246 = vmatprep.mubr.f32.mxu0 0.0
  %1247 = vmatmul.mubr.f32.gmra.mxu0 %v1175
  %v1248 = vpop.f32.mrf.mxu0
  %v1249 = vadd.f32 0.0, %v1248
  %v1250 = vpop.f32.mrf.mxu0
  %1251 = vdwg.mxu0
  %v1252 = vmul.f32 %v1244, %v1169
  %v1253 = vmul.f32 %v1249, %v1170
  %vm1254 = vcmp.gt.f32.partialorder %v1252, 0.0
  %vm1255 = vcmp.gt.f32.partialorder %v1253, 0.0
  %v1256 = vmin.f32 %v1252, 0.0
  %v1257 = vmin.f32 %v1253, 0.0
  %v1258 = vmul.f32 %v1256, 1.442695
  %v1259 = vpow.pop %v1258
  %v1260 = vmul.f32 %v1257, 1.442695
  %v1261 = vpow.pop %v1260
  %v1262 = vsub.f32 %v1259, 1.0
  %v1263 = vsub.f32 %v1261, 1.0
  %v1264 = vsel %vm1254, %v1252, %v1262
  %v1265 = vsel %vm1255, %v1253, %v1263
  %1266 = vst [vmem:[%s8] sm:$0xff] %v1059
  %1267 = vst [vmem:[%s8 + $0x8] sm:$0xff] %v1060
  %1268 = vst [vmem:[%s8 + $0x10] sm:$0xff] %v1264
  %1269 = vst [vmem:[%s8 + $0x18] sm:$0xff] %v1265
  // Predicated region
  $region34: #{stgat_forward.1} parent=0 // pred_check
    _
  $region35: #{stgat_forward.1} parent=0 // pred_check_branch
    %1271 = sbr.rel (0) target = $region37
  $region36: #{stgat_forward.1} parent=0 // pred_region
    _
  $region37: #{stgat_forward.1} parent=0 // pred_fallthru
    _
  // Predicated region
  $region38: #{stgat_forward.1} parent=0 // pred_check
    _
  $region39: #{stgat_forward.1} parent=0 // pred_check_branch
    %1273 = sbr.rel (0) target = $region41
  $region40: #{stgat_forward.1} parent=0 // pred_region
    _
  $region41: #{stgat_forward.1} parent=0 // pred_fallthru
    _

</llo_original>
